<compile_context>
chip_gen: v6e
topology: v6e:2x2x1
jax: 0.10.0
libtpu: 0.0.40
codegen_flags: <defaults>
</compile_context>

<pallas_src>
import functools

import jax
import jax.numpy as jnp
from jax import lax
from jax.experimental import pallas as pl
from jax.experimental.pallas import tpu as pltpu

LANE = 128       # vreg lane width
SUBLANE = 8      # vreg sublane depth (f32)


def _round_up(n, m):
    return ((n + m - 1) // m) * m


def fuse_qkv_weights(w_q, w_k, w_v, *, mxu_dtype=jnp.bfloat16):
    """One-time weight prep (cache the result; weights are static).

    Fuses [Wq | Wk | Wv] into a single lane-dense, zero-padded slab, folds the
    softmax scale 1/sqrt(d_out) into the Wq columns, and casts to the MXU
    operand dtype.  Zero-padded rows/columns contribute nothing to scores or
    context, so results are exact.
    """
    d_in, d_out = w_q.shape
    d_in_pad = _round_up(d_in, LANE)
    d_pad = _round_up(d_out, LANE)
    scale = 1.0 / (float(d_out) ** 0.5)

    slab = jnp.zeros((d_in_pad, 3 * d_pad), jnp.float32)
    slab = slab.at[:d_in, 0 * d_pad:0 * d_pad + d_out].set(w_q * scale)
    slab = slab.at[:d_in, 1 * d_pad:1 * d_pad + d_out].set(w_k)
    slab = slab.at[:d_in, 2 * d_pad:2 * d_pad + d_out].set(w_v)
    return slab.astype(mxu_dtype), d_out


def _flash_attn_kernel(xq_ref, xkv_ref, wqkv_ref, o_ref,
                       q_scr, m_scr, l_scr, acc_scr,
                       *, d_pad, tk, seq_len, s_pad):
    """One (q-tile, kv-tile) step of fused projection + flash attention.

    xq_ref:   (tq, d_in_pad) bf16   rows of x for this q tile
    xkv_ref:  (tk, d_in_pad) bf16   rows of x for this kv tile
    wqkv_ref: (d_in_pad, 3*d_pad) bf16  fused [Wq*scale | Wk | Wv] (resident)
    o_ref:    (tq, d_pad) f32       context tile (written on last kv step)
    """
    kv = pl.program_id(1)

    # ---- init (once per q tile): project q, reset online-softmax state ----
    @pl.when(kv == 0)
    def _init():
        q = jnp.dot(xq_ref[...], wqkv_ref[:, 0:d_pad],
                    preferred_element_type=jnp.float32)    # scale folded in Wq
        q_scr[...] = q.astype(q_scr.dtype)                  # bf16 MXU operand
        m_scr[...] = jnp.full(m_scr.shape, -jnp.inf, m_scr.dtype)
        l_scr[...] = jnp.zeros(l_scr.shape, l_scr.dtype)
        acc_scr[...] = jnp.zeros(acc_scr.shape, acc_scr.dtype)

    # ---- per-kv-tile: project k/v, online-softmax update -------------------
    xkv = xkv_ref[...]
    k = jnp.dot(xkv, wqkv_ref[:, 1 * d_pad:2 * d_pad],
                preferred_element_type=jnp.float32).astype(jnp.bfloat16)
    v = jnp.dot(xkv, wqkv_ref[:, 2 * d_pad:3 * d_pad],
                preferred_element_type=jnp.float32).astype(jnp.bfloat16)

    # scores = q @ k.T without materializing a transpose (contract lane dims).
    s = lax.dot_general(q_scr[...], k, (((1,), (1,)), ((), ())),
                        preferred_element_type=jnp.float32)   # (tq, tk) f32

    m_prev = m_scr[...]
    m_new = jnp.maximum(m_prev, jnp.max(s, axis=-1, keepdims=True))
    e = jnp.exp(s - m_new)                                     # f32 (v5e-safe)
    # TODO(synk): on v6e/v7x a bf16 exp would relieve the EUP slot; kept f32
    # for v5e portability and accuracy of the softmax statistics.

    # Zero padded key columns AFTER the exp (cheaper than -inf on scores).
    # Padded keys are projections of all-zero x rows, so their score is 0 and
    # can only raise the row max safely; zeroing e removes them exactly.
    if seq_len < s_pad:
        col = kv * tk + lax.broadcasted_iota(jnp.int32, s.shape, 1)
        e = jnp.where(col < seq_len, e, 0.0)

    alpha = jnp.exp(m_prev - m_new)                            # f32 correction
    l_scr[...] = alpha * l_scr[...] + jnp.sum(e, axis=-1, keepdims=True)
    acc_scr[...] = alpha * acc_scr[...] + jnp.dot(
        e.astype(jnp.bfloat16), v, preferred_element_type=jnp.float32)
    m_scr[...] = m_new

    # ---- finalize (last kv tile): normalize, lane-dense unmasked store -----
    @pl.when(kv == pl.num_programs(1) - 1)
    def _fin():
        inv = pl.reciprocal(l_scr[...], approx=True)           # EUP slot
        o_ref[...] = (acc_scr[...] * inv).astype(o_ref.dtype)


def self_attention(x, w_qkv, d_out, *, tq=None, tk=None):
    """x: (S, d_in) f32; w_qkv: fused slab from fuse_qkv_weights().
    Returns (S, d_out) f32 context vectors."""
    S, d_in = x.shape
    d_in_pad = w_qkv.shape[0]
    d_pad = w_qkv.shape[1] // 3

    # Lane-dense key axis: pad S to a multiple of 128 (not 8) so score tiles
    # use full vreg lanes and the q@k.T N-dimension fills the MXU.
    s_pad = _round_up(S, LANE)
    if tq is None:
        tq = 256 if s_pad % 256 == 0 else 128   # MXU-shaped tiles
    if tk is None:
        tk = 256 if s_pad % 256 == 0 else 128
    nq, nk = s_pad // tq, s_pad // tk

    # Pad x once; bf16 halves streamed HBM bytes (softmax stats stay f32).
    x_p = jnp.zeros((s_pad, d_in_pad), jnp.bfloat16).at[:S, :d_in].set(
        x.astype(jnp.bfloat16))

    kernel = functools.partial(_flash_attn_kernel, d_pad=d_pad, tk=tk,
                               seq_len=S, s_pad=s_pad)

    # Explicit VMEM budget (double-buffered inputs/output + scratch) with 2x
    # headroom; floor at 32 MiB so we never shrink the default scoped limit.
    vmem_bytes = (
        2 * tq * d_in_pad * 2            # xq tile, double-buffered (bf16)
        + 2 * tk * d_in_pad * 2          # xkv tile, double-buffered (bf16)
        + 2 * d_in_pad * 3 * d_pad * 2   # resident w_qkv slab (budget 2 bufs)
        + 2 * tq * d_pad * 4             # output tile, double-buffered (f32)
        + tq * d_pad * 2                 # q scratch (bf16)
        + 2 * tq * LANE * 4              # m/l scratch (lane-padded estimate)
        + tq * d_pad * 4                 # f32 accumulator
    )
    vmem_limit = int(min(max(2 * vmem_bytes, 32 << 20), 100 << 20))

    flops = 2 * s_pad * d_in_pad * 3 * d_pad + 4 * s_pad * s_pad * d_pad
    cost = pl.CostEstimate(
        flops=flops,
        transcendentals=s_pad * s_pad,
        bytes_accessed=2 * x_p.size * 2 + w_qkv.size * 2 + s_pad * d_pad * 4)

    out_padded = pl.pallas_call(
        kernel,
        out_shape=jax.ShapeDtypeStruct((s_pad, d_pad), jnp.float32),
        grid_spec=pltpu.PrefetchScalarGridSpec(
            num_scalar_prefetch=0,
            grid=(nq, nk),                                  # kv (reduction) last
            in_specs=[
                pl.BlockSpec((tq, d_in_pad), lambda i, k: (i, 0)),        # x -> q
                pl.BlockSpec((tk, d_in_pad), lambda i, k: (k, 0)),        # x -> k,v
                pl.BlockSpec((d_in_pad, 3 * d_pad), lambda i, k: (0, 0)),  # resident
            ],
            out_specs=pl.BlockSpec((tq, d_pad), lambda i, k: (i, 0)),
            scratch_shapes=[
                pltpu.VMEM((tq, d_pad), jnp.bfloat16),   # scaled q (bf16)
                pltpu.VMEM((tq, 1), jnp.float32),        # running max
                pltpu.VMEM((tq, 1), jnp.float32),        # running denom
                pltpu.VMEM((tq, d_pad), jnp.float32),    # f32 accumulator
            ]),
        compiler_params=pltpu.CompilerParams(
            dimension_semantics=("parallel", "arbitrary"),
            vmem_limit_bytes=vmem_limit),
        cost_estimate=cost,
    )(x_p, x_p, w_qkv)

    return out_padded[:S, :d_out]


def reference_self_attention(x, w_q, w_k, w_v):
    q = x @ w_q
    k = x @ w_k
    v = x @ w_v
    scores = q @ k.T
    weights = jax.nn.softmax(scores / jnp.sqrt(jnp.float32(k.shape[-1])), axis=-1)
    return weights @ v


if __name__ == "__main__":
    # Small shapes consistent with the module: inputs (seq, d_in), d_out = 2.
    S, d_in, d_out = 8, 4, 2

    key = jax.random.PRNGKey(0)
    kx, kq, kk, kv = jax.random.split(key, 4)

    x = jax.random.normal(kx, (S, d_in), dtype=jnp.float32)

    # Deterministic weight init mimicking torch.nn.Linear default:
    # uniform(-1/sqrt(d_in), 1/sqrt(d_in)), stored as (d_in, d_out).
    bound = 1.0 / (d_in ** 0.5)
    w_q = jax.random.uniform(kq, (d_in, d_out), jnp.float32, -bound, bound)
    w_k = jax.random.uniform(kk, (d_in, d_out), jnp.float32, -bound, bound)
    w_v = jax.random.uniform(kv, (d_in, d_out), jnp.float32, -bound, bound)

    # One-time weight prep (would be cached alongside the params in real use).
    w_qkv, d_out_real = fuse_qkv_weights(w_q, w_k, w_v)

    out = self_attention(x, w_qkv, d_out_real)
    out = jax.block_until_ready(out)

    ref = reference_self_attention(x, w_q, w_k, w_v)
    assert out.shape == (S, d_out)
    # bf16 MXU operands + approx EUP reciprocal -> ~1e-2 absolute tolerance.
    assert jnp.allclose(out, ref, atol=2e-2, rtol=2e-2), (
        f"max abs err = {jnp.max(jnp.abs(out - ref))}")

    print("KERNEL_OK")
</pallas_src>

<mosaic_0001>
module attributes {stable_mosaic.version = 11 : i64} {
  func.func @_flash_attn_kernel(%arg0: i32, %arg1: i32, %arg2: memref<128x128xbf16, #tpu.memory_space<vmem>>, %arg3: memref<128x128xbf16, #tpu.memory_space<vmem>>, %arg4: memref<128x384xbf16, #tpu.memory_space<vmem>>, %arg5: memref<128x128xf32, #tpu.memory_space<vmem>>, %arg6: memref<128x128xbf16, #tpu.memory_space<vmem>>, %arg7: memref<128x1xf32, #tpu.memory_space<vmem>>, %arg8: memref<128x1xf32, #tpu.memory_space<vmem>>, %arg9: memref<128x128xf32, #tpu.memory_space<vmem>>) attributes {dimension_semantics = [#tpu.dimension_semantics<parallel>, #tpu.dimension_semantics<arbitrary>], iteration_bounds = array<i64: 1, 1>, scalar_prefetch = 0 : i64, scratch_operands = 4 : i64, tpu.core_type = #tpu.core_type<tc>, window_params = [{transform_indices = @transform_0, window_bounds = array<i64: 128, 128>}, {transform_indices = @transform_1, window_bounds = array<i64: 128, 128>}, {pipeline_mode = #tpu.pipeline_mode<synchronous>, transform_indices = @transform_2, window_bounds = array<i64: 128, 384>}, {transform_indices = @transform_3, window_bounds = array<i64: 128, 128>}]} {
    %c0_i32 = arith.constant 0 : i32
    %0 = arith.cmpi eq, %arg1, %c0_i32 : i32
    %1 = arith.extui %0 : i1 to i32
    %c0_i32_0 = arith.constant 0 : i32
    %2 = arith.cmpi ne, %1, %c0_i32_0 : i32
    scf.if %2 {
      %c0_26 = arith.constant 0 : index
      %c0_27 = arith.constant 0 : index
      %46 = vector.load %arg2[%c0_26, %c0_27] : memref<128x128xbf16, #tpu.memory_space<vmem>>, vector<128x128xbf16>
      %c0_28 = arith.constant 0 : index
      %c0_29 = arith.constant 0 : index
      %47 = vector.load %arg4[%c0_28, %c0_29] : memref<128x384xbf16, #tpu.memory_space<vmem>>, vector<128x128xbf16>
      %cst_30 = arith.constant dense<0.000000e+00> : vector<128x128xf32>
      %48 = tpu.matmul %46, %47, %cst_30 {dimension_numbers = #tpu.dot_dimension_numbers<[1], [0], [0], [1], [0, 0, 1, 1], [], []>} : vector<128x128xbf16>, vector<128x128xbf16>, vector<128x128xf32> -> vector<128x128xf32>
      %49 = arith.truncf %48 : vector<128x128xf32> to vector<128x128xbf16>
      %c0_31 = arith.constant 0 : index
      %c0_32 = arith.constant 0 : index
      %50 = vector.load %arg6[%c0_31, %c0_32] : memref<128x128xbf16, #tpu.memory_space<vmem>>, vector<128x128xbf16>
      tpu.vector_store %arg6[%c0_31, %c0_32], %49 {strides = array<i32>} : memref<128x128xbf16, #tpu.memory_space<vmem>>, vector<128x128xbf16>,
      %cst_33 = arith.constant 0xFF800000 : f32
      %51 = vector.broadcast %cst_33 : f32 to vector<128x1xf32>
      %c0_34 = arith.constant 0 : index
      %c0_35 = arith.constant 0 : index
      %52 = vector.load %arg7[%c0_34, %c0_35] : memref<128x1xf32, #tpu.memory_space<vmem>>, vector<128x1xf32>
      tpu.vector_store %arg7[%c0_34, %c0_35], %51 {strides = array<i32>} : memref<128x1xf32, #tpu.memory_space<vmem>>, vector<128x1xf32>,
      %cst_36 = arith.constant 0.000000e+00 : f32
      %53 = vector.broadcast %cst_36 : f32 to vector<128x1xf32>
      %c0_37 = arith.constant 0 : index
      %c0_38 = arith.constant 0 : index
      %54 = vector.load %arg8[%c0_37, %c0_38] : memref<128x1xf32, #tpu.memory_space<vmem>>, vector<128x1xf32>
      tpu.vector_store %arg8[%c0_37, %c0_38], %53 {strides = array<i32>} : memref<128x1xf32, #tpu.memory_space<vmem>>, vector<128x1xf32>,
      %cst_39 = arith.constant 0.000000e+00 : f32
      %55 = vector.broadcast %cst_39 : f32 to vector<128x128xf32>
      %c0_40 = arith.constant 0 : index
      %c0_41 = arith.constant 0 : index
      %56 = vector.load %arg9[%c0_40, %c0_41] : memref<128x128xf32, #tpu.memory_space<vmem>>, vector<128x128xf32>
      tpu.vector_store %arg9[%c0_40, %c0_41], %55 {strides = array<i32>} : memref<128x128xf32, #tpu.memory_space<vmem>>, vector<128x128xf32>,
    } else {
    }
    %c0 = arith.constant 0 : index
    %c0_1 = arith.constant 0 : index
    %3 = vector.load %arg3[%c0, %c0_1] : memref<128x128xbf16, #tpu.memory_space<vmem>>, vector<128x128xbf16>
    %c0_2 = arith.constant 0 : index
    %c128 = arith.constant 128 : index
    %4 = vector.load %arg4[%c0_2, %c128] : memref<128x384xbf16, #tpu.memory_space<vmem>>, vector<128x128xbf16>
    %cst = arith.constant dense<0.000000e+00> : vector<128x128xf32>
    %5 = tpu.matmul %3, %4, %cst {dimension_numbers = #tpu.dot_dimension_numbers<[1], [0], [0], [1], [0, 0, 1, 1], [], []>} : vector<128x128xbf16>, vector<128x128xbf16>, vector<128x128xf32> -> vector<128x128xf32>
    %6 = arith.truncf %5 : vector<128x128xf32> to vector<128x128xbf16>
    %c0_3 = arith.constant 0 : index
    %c256 = arith.constant 256 : index
    %7 = vector.load %arg4[%c0_3, %c256] : memref<128x384xbf16, #tpu.memory_space<vmem>>, vector<128x128xbf16>
    %cst_4 = arith.constant dense<0.000000e+00> : vector<128x128xf32>
    %8 = tpu.matmul %3, %7, %cst_4 {dimension_numbers = #tpu.dot_dimension_numbers<[1], [0], [0], [1], [0, 0, 1, 1], [], []>} : vector<128x128xbf16>, vector<128x128xbf16>, vector<128x128xf32> -> vector<128x128xf32>
    %9 = arith.truncf %8 : vector<128x128xf32> to vector<128x128xbf16>
    %c0_5 = arith.constant 0 : index
    %c0_6 = arith.constant 0 : index
    %10 = vector.load %arg6[%c0_5, %c0_6] : memref<128x128xbf16, #tpu.memory_space<vmem>>, vector<128x128xbf16>
    %cst_7 = arith.constant dense<0.000000e+00> : vector<128x128xf32>
    %11 = tpu.matmul %10, %6, %cst_7 {dimension_numbers = #tpu.dot_dimension_numbers<[1], [1], [0], [0], [0, 0, 1, 0], [], []>} : vector<128x128xbf16>, vector<128x128xbf16>, vector<128x128xf32> -> vector<128x128xf32>
    %c0_8 = arith.constant 0 : index
    %c0_9 = arith.constant 0 : index
    %12 = vector.load %arg7[%c0_8, %c0_9] : memref<128x1xf32, #tpu.memory_space<vmem>>, vector<128x1xf32>
    %cst_10 = arith.constant dense<0xFF800000> : vector<128xf32>
    %13 = vector.multi_reduction <maximumf>, %11, %cst_10 [1] : vector<128x128xf32> to vector<128xf32>
    %14 = vector.shape_cast %13 : vector<128xf32> to vector<128x1xf32>
    %15 = arith.maximumf %12, %14 : vector<128x1xf32>
    %16 = vector.broadcast %15 : vector<128x1xf32> to vector<128x128xf32>
    %17 = arith.subf %11, %16 : vector<128x128xf32>
    %18 = math.exp %17 : vector<128x128xf32>
    %c128_i32 = arith.constant 128 : i32
    %19 = arith.muli %arg1, %c128_i32 : i32
    %20 = tpu.iota {dimensions = array<i32: 1>} : vector<128x128xi32>
    %21 = vector.broadcast %19 : i32 to vector<128x128xi32>
    %22 = arith.addi %21, %20 : vector<128x128xi32>
    %c8_i32 = arith.constant 8 : i32
    %23 = vector.broadcast %c8_i32 : i32 to vector<128x128xi32>
    %24 = arith.cmpi slt, %22, %23 : vector<128x128xi32>
    %cst_11 = arith.constant 0.000000e+00 : f32
    %25 = vector.broadcast %cst_11 : f32 to vector<128x128xf32>
    %26 = arith.select %24, %18, %25 : vector<128x128xi1>, vector<128x128xf32>
    %27 = arith.subf %12, %15 : vector<128x1xf32>
    %28 = math.exp %27 : vector<128x1xf32>
    %c0_12 = arith.constant 0 : index
    %c0_13 = arith.constant 0 : index
    %29 = vector.load %arg8[%c0_12, %c0_13] : memref<128x1xf32, #tpu.memory_space<vmem>>, vector<128x1xf32>
    %30 = arith.mulf %28, %29 : vector<128x1xf32>
    %cst_14 = arith.constant dense<0.000000e+00> : vector<128xf32>
    %31 = vector.multi_reduction <add>, %26, %cst_14 [1] : vector<128x128xf32> to vector<128xf32>
    %32 = vector.shape_cast %31 : vector<128xf32> to vector<128x1xf32>
    %33 = arith.addf %30, %32 : vector<128x1xf32>
    %c0_15 = arith.constant 0 : index
    %c0_16 = arith.constant 0 : index
    %34 = vector.load %arg8[%c0_15, %c0_16] : memref<128x1xf32, #tpu.memory_space<vmem>>, vector<128x1xf32>
    tpu.vector_store %arg8[%c0_15, %c0_16], %33 {strides = array<i32>} : memref<128x1xf32, #tpu.memory_space<vmem>>, vector<128x1xf32>,
    %c0_17 = arith.constant 0 : index
    %c0_18 = arith.constant 0 : index
    %35 = vector.load %arg9[%c0_17, %c0_18] : memref<128x128xf32, #tpu.memory_space<vmem>>, vector<128x128xf32>
    %36 = vector.broadcast %28 : vector<128x1xf32> to vector<128x128xf32>
    %37 = arith.mulf %36, %35 : vector<128x128xf32>
    %38 = arith.truncf %26 : vector<128x128xf32> to vector<128x128xbf16>
    %cst_19 = arith.constant dense<0.000000e+00> : vector<128x128xf32>
    %39 = tpu.matmul %38, %9, %cst_19 {dimension_numbers = #tpu.dot_dimension_numbers<[1], [0], [0], [1], [0, 0, 1, 1], [], []>} : vector<128x128xbf16>, vector<128x128xbf16>, vector<128x128xf32> -> vector<128x128xf32>
    %40 = arith.addf %37, %39 : vector<128x128xf32>
    %c0_20 = arith.constant 0 : index
    %c0_21 = arith.constant 0 : index
    %41 = vector.load %arg9[%c0_20, %c0_21] : memref<128x128xf32, #tpu.memory_space<vmem>>, vector<128x128xf32>
    tpu.vector_store %arg9[%c0_20, %c0_21], %40 {strides = array<i32>} : memref<128x128xf32, #tpu.memory_space<vmem>>, vector<128x128xf32>,
    %c0_22 = arith.constant 0 : index
    %c0_23 = arith.constant 0 : index
    %42 = vector.load %arg7[%c0_22, %c0_23] : memref<128x1xf32, #tpu.memory_space<vmem>>, vector<128x1xf32>
    tpu.vector_store %arg7[%c0_22, %c0_23], %15 {strides = array<i32>} : memref<128x1xf32, #tpu.memory_space<vmem>>, vector<128x1xf32>,
    %c0_i32_24 = arith.constant 0 : i32
    %43 = arith.cmpi eq, %arg1, %c0_i32_24 : i32
    %44 = arith.extui %43 : i1 to i32
    %c0_i32_25 = arith.constant 0 : i32
    %45 = arith.cmpi ne, %44, %c0_i32_25 : i32
    scf.if %45 {
      %c0_26 = arith.constant 0 : index
      %c0_27 = arith.constant 0 : index
      %46 = vector.load %arg8[%c0_26, %c0_27] : memref<128x1xf32, #tpu.memory_space<vmem>>, vector<128x1xf32>
      %47 = tpu.reciprocal %46 {approx = true} : vector<128x1xf32> -> vector<128x1xf32>
      %c0_28 = arith.constant 0 : index
      %c0_29 = arith.constant 0 : index
      %48 = vector.load %arg9[%c0_28, %c0_29] : memref<128x128xf32, #tpu.memory_space<vmem>>, vector<128x128xf32>
      %49 = vector.broadcast %47 : vector<128x1xf32> to vector<128x128xf32>
      %50 = arith.mulf %48, %49 : vector<128x128xf32>
      %c0_30 = arith.constant 0 : index
      %c0_31 = arith.constant 0 : index
      %51 = vector.load %arg5[%c0_30, %c0_31] : memref<128x128xf32, #tpu.memory_space<vmem>>, vector<128x128xf32>
      tpu.vector_store %arg5[%c0_30, %c0_31], %50 {strides = array<i32>} : memref<128x128xf32, #tpu.memory_space<vmem>>, vector<128x128xf32>,
    } else {
    }
    return
  }
  func.func @transform_0(%arg0: i32, %arg1: i32) -> (i32, i32) {
    %c0_i32 = arith.constant 0 : i32
    %c0_i32_0 = arith.constant 0 : i32
    return %arg0, %c0_i32 : i32, i32
  }
  func.func @transform_1(%arg0: i32, %arg1: i32) -> (i32, i32) {
    %c0_i32 = arith.constant 0 : i32
    %c0_i32_0 = arith.constant 0 : i32
    return %arg1, %c0_i32 : i32, i32
  }
  func.func @transform_2(%arg0: i32, %arg1: i32) -> (i32, i32) {
    %c0_i32 = arith.constant 0 : i32
    %c0_i32_0 = arith.constant 0 : i32
    %c0_i32_1 = arith.constant 0 : i32
    return %c0_i32, %c0_i32_0 : i32, i32
  }
  func.func @transform_3(%arg0: i32, %arg1: i32) -> (i32, i32) {
    %c0_i32 = arith.constant 0 : i32
    %c0_i32_0 = arith.constant 0 : i32
    return %arg0, %c0_i32 : i32, i32
  }
}

</mosaic_0001>

<llo_original>
// kernel: tpu_custom_call.1
$region0: #{tpu_custom_call.1}
  #allocation0 [shape = 'u32[]', space=smem, size = 0x4, offset = 0x4, fixed_abs, tag = 'smem constant byte address 0x4 - core index']
  #allocation1 [shape = 'u32[144,128]{1,0:T(1,128)}', space=vmem, size = 0x12000, scoped, tag = 'internal scratch']
  #allocation2 [shape = 'bf16[128,128]{1,0:T(8,128)(2,1)}', space=vmem, size = 0x8000, scoped, tag = 'scratch operand']
  #allocation3 [shape = 'f32[128,1]{1,0:T(8,128)}', space=vmem, size = 0x10000, scoped, tag = 'scratch operand']
  #allocation4 [shape = 'f32[128,1]{1,0:T(8,128)}', space=vmem, size = 0x10000, scoped, tag = 'scratch operand']
  #allocation5 [shape = 'f32[128,128]{1,0:T(8,128)}', space=vmem, size = 0x10000, scoped, tag = 'scratch operand']
  %s0 = inlined_call_operand.hbm [shape: bf16[128,128], index: 0, kind: input, shape index: {}]
  %s1 = inlined_call_operand.hbm [shape: bf16[128,128], index: 1, kind: input, shape index: {}]
  %s2 = inlined_call_operand.hbm [shape: bf16[128,384], index: 2, kind: input, shape index: {}]
  %s3 = inlined_call_operand.hbm [shape: f32[128,128], index: 3, kind: output, shape index: {}]
  %s4 = sld [smem:[#allocation0]]
  $region42: #{tpu_custom_call.1} parent=0
    _
  %s6 = ssub.s32 1, %s4
  %s7 = scalar_select 0, %s6, %s4
  $region1: #{tpu_custom_call.1} parent=0
    #allocation6 [shape = 'u8[32768]{0}', space=vmem, size = 0x8000, scoped, tag = 'input window, operand 0, single buffered']
    #allocation7 [shape = 's32[1]{0}', space=sflag, size = 0x4, scoped, tag = 'scoped memory for tpu_custom_call.1']
    #allocation8 [shape = 's32[1]{0}', space=sflag, size = 0x4, scoped, tag = 'scoped memory for tpu_custom_call.1']
    #allocation9 [shape = 'u8[32768]{0}', space=vmem, size = 0x8000, scoped, tag = 'input window, operand 1, single buffered']
    #allocation10 [shape = 's32[1]{0}', space=sflag, size = 0x4, scoped, tag = 'scoped memory for tpu_custom_call.1']
    #allocation11 [shape = 'u8[98304]{0}', space=vmem, size = 0x18000, scoped, tag = 'input window, operand 2, single buffered']
    #allocation12 [shape = 'u8[65536]{0}', space=vmem, size = 0x10000, scoped, tag = 'output window, operand 0, single buffered']
    %8 = vsyncpa [#allocation7], 0
    %9 = vsyncpa [#allocation10], 0
    %10 = vsyncpa [#allocation8], 0
    // Predicated region
    $region2: #{tpu_custom_call.1} parent=1 // pred_check
      _
    $region3: #{tpu_custom_call.1} parent=1 // pred_check_branch
      %12 = sbr.rel (0) target = $region5
    $region4: #{tpu_custom_call.1} parent=1 // pred_region
      %s14 = ssub.s32 1024, 1024
      %15 = vsyncadd [#allocation7], %s14
      %s16 = sshll.u32 [#allocation6], 4
      %s17 = int_to_ptr.vmem [resolvable:$true] %s16
      %22 = dma.hbm_to_vmem [thread:$0]  %s0, 1024, %s17, [#allocation7], 64, 64, 4
    $region5: #{tpu_custom_call.1} parent=1 // pred_fallthru
      _
    // Predicated region
    $region6: #{tpu_custom_call.1} parent=1 // pred_check
      _
    $region7: #{tpu_custom_call.1} parent=1 // pred_check_branch
      %24 = sbr.rel (0) target = $region9
    $region8: #{tpu_custom_call.1} parent=1 // pred_region
      %s26 = ssub.s32 1024, 1024
      %27 = vsyncadd [#allocation10], %s26
      %s28 = sshll.u32 [#allocation9], 4
      %s29 = int_to_ptr.vmem [resolvable:$true] %s28
      %34 = dma.hbm_to_vmem [thread:$0]  %s1, 1024, %s29, [#allocation10], 64, 64, 4
    $region9: #{tpu_custom_call.1} parent=1 // pred_fallthru
      _
    // Predicated region
    $region10: #{tpu_custom_call.1} parent=1 // pred_check
      _
    $region11: #{tpu_custom_call.1} parent=1 // pred_check_branch
      %36 = sbr.rel (0) target = $region13
    $region12: #{tpu_custom_call.1} parent=1 // pred_region
      %s38 = ssub.s32 3072, 3072
      %39 = vsyncadd [#allocation10], %s38
      %s40 = sshll.u32 [#allocation11], 4
      %s41 = int_to_ptr.vmem [resolvable:$true] %s40
      %46 = dma.hbm_to_vmem [thread:$0]  %s2, 3072, %s41, [#allocation10], 192, 192, 12
    $region13: #{tpu_custom_call.1} parent=1 // pred_fallthru
      _
    // Predicated region
    $region14: #{tpu_custom_call.1} parent=1 // pred_check
      _
    $region15: #{tpu_custom_call.1} parent=1 // pred_check_branch
      %48 = sbr.rel (0) target = $region17
    $region16: #{tpu_custom_call.1} parent=1 // pred_region
      %49 = dma.done [#allocation7], 1024
    $region17: #{tpu_custom_call.1} parent=1 // pred_fallthru
      _
    // Predicated region
    $region18: #{tpu_custom_call.1} parent=1 // pred_check
      _
    $region19: #{tpu_custom_call.1} parent=1 // pred_check_branch
      %51 = sbr.rel (0) target = $region21
    $region20: #{tpu_custom_call.1} parent=1 // pred_region
      %52 = dma.done [#allocation10], 1024
    $region21: #{tpu_custom_call.1} parent=1 // pred_fallthru
      _
    // Predicated region
    $region22: #{tpu_custom_call.1} parent=1 // pred_check
      _
    $region23: #{tpu_custom_call.1} parent=1 // pred_check_branch
      %54 = sbr.rel (0) target = $region25
    $region24: #{tpu_custom_call.1} parent=1 // pred_region
      %55 = dma.done [#allocation10], 3072
    $region25: #{tpu_custom_call.1} parent=1 // pred_fallthru
      _
    %p57 = scmp.eq.s32.totalorder 0, 0
    // Predicated region
    $region26: #{tpu_custom_call.1} parent=1 // pred_check
      %p58 = pneg %p57
    $region27: #{tpu_custom_call.1} parent=1 // pred_check_branch
      %60 = sbr.rel (%p58) target = $region29
    $region28: #{tpu_custom_call.1} parent=1 // pred_region
      %v61 = vld [vmem:[#allocation6] sm:$0xf]
      %v62 = vld [vmem:[#allocation6 + $0x4] sm:$0xf]
      %v63 = vld [vmem:[#allocation6 + $0x8] sm:$0xf]
      %v64 = vld [vmem:[#allocation6 + $0xc] sm:$0xf]
      %v65 = vld [vmem:[#allocation6 + $0x10] sm:$0xf]
      %v66 = vld [vmem:[#allocation6 + $0x14] sm:$0xf]
      %v67 = vld [vmem:[#allocation6 + $0x18] sm:$0xf]
      %v68 = vld [vmem:[#allocation6 + $0x1c] sm:$0xf]
      %v69 = vld [vmem:[#allocation6 + $0x20] sm:$0xf]
      %v70 = vld [vmem:[#allocation6 + $0x24] sm:$0xf]
      %v71 = vld [vmem:[#allocation6 + $0x28] sm:$0xf]
      %v72 = vld [vmem:[#allocation6 + $0x2c] sm:$0xf]
      %v73 = vld [vmem:[#allocation6 + $0x30] sm:$0xf]
      %v74 = vld [vmem:[#allocation6 + $0x34] sm:$0xf]
      %v75 = vld [vmem:[#allocation6 + $0x38] sm:$0xf]
      %v76 = vld [vmem:[#allocation6 + $0x3c] sm:$0xf]
      %v77 = vld [vmem:[#allocation11] sm:$0xf]
      %v78 = vld [vmem:[#allocation11 + $0xc] sm:$0xf]
      %v79 = vld [vmem:[#allocation11 + $0x18] sm:$0xf]
      %v80 = vld [vmem:[#allocation11 + $0x24] sm:$0xf]
      %v81 = vld [vmem:[#allocation11 + $0x30] sm:$0xf]
      %v82 = vld [vmem:[#allocation11 + $0x3c] sm:$0xf]
      %v83 = vld [vmem:[#allocation11 + $0x48] sm:$0xf]
      %v84 = vld [vmem:[#allocation11 + $0x54] sm:$0xf]
      %v85 = vld [vmem:[#allocation11 + $0x60] sm:$0xf]
      %v86 = vld [vmem:[#allocation11 + $0x6c] sm:$0xf]
      %v87 = vld [vmem:[#allocation11 + $0x78] sm:$0xf]
      %v88 = vld [vmem:[#allocation11 + $0x84] sm:$0xf]
      %v89 = vld [vmem:[#allocation11 + $0x90] sm:$0xf]
      %v90 = vld [vmem:[#allocation11 + $0x9c] sm:$0xf]
      %v91 = vld [vmem:[#allocation11 + $0xa8] sm:$0xf]
      %v92 = vld [vmem:[#allocation11 + $0xb4] sm:$0xf]
      %v109 = vunpack.c.l.b16 %v61
      %v110 = vunpack.c.l.b16 %v62
      %v111 = vunpack.c.l.b16 %v63
      %v112 = vunpack.c.l.b16 %v64
      %v113 = vunpack.c.l.b16 %v65
      %v114 = vunpack.c.l.b16 %v66
      %v115 = vunpack.c.l.b16 %v67
      %v116 = vunpack.c.l.b16 %v68
      %v117 = vunpack.c.l.b16 %v69
      %v118 = vunpack.c.l.b16 %v70
      %v119 = vunpack.c.l.b16 %v71
      %v120 = vunpack.c.l.b16 %v72
      %v121 = vunpack.c.l.b16 %v73
      %v122 = vunpack.c.l.b16 %v74
      %v123 = vunpack.c.l.b16 %v75
      %v124 = vunpack.c.l.b16 %v76
      %v125 = vpack.c.b16 %v110, %v109
      %v126 = vpack.c.b16 %v112, %v111
      %v127 = vpack.c.b16 %v114, %v113
      %v128 = vpack.c.b16 %v116, %v115
      %v129 = vpack.c.b16 %v118, %v117
      %v130 = vpack.c.b16 %v120, %v119
      %v131 = vpack.c.b16 %v122, %v121
      %v132 = vpack.c.b16 %v124, %v123
      %v157 = vunpack.c.l.b16 %v77
      %v158 = vunpack.c.l.b16 %v78
      %v159 = vunpack.c.l.b16 %v79
      %v160 = vunpack.c.l.b16 %v80
      %v161 = vunpack.c.l.b16 %v81
      %v162 = vunpack.c.l.b16 %v82
      %v163 = vunpack.c.l.b16 %v83
      %v164 = vunpack.c.l.b16 %v84
      %v165 = vunpack.c.l.b16 %v85
      %v166 = vunpack.c.l.b16 %v86
      %v167 = vunpack.c.l.b16 %v87
      %v168 = vunpack.c.l.b16 %v88
      %v169 = vunpack.c.l.b16 %v89
      %v170 = vunpack.c.l.b16 %v90
      %v171 = vunpack.c.l.b16 %v91
      %v172 = vunpack.c.l.b16 %v92
      %v173 = vpack.c.b16 %v158, %v157
      %v174 = vpack.c.b16 %v160, %v159
      %v175 = vpack.c.b16 %v162, %v161
      %v176 = vpack.c.b16 %v164, %v163
      %v177 = vpack.c.b16 %v166, %v165
      %v178 = vpack.c.b16 %v168, %v167
      %v179 = vpack.c.b16 %v170, %v169
      %v180 = vpack.c.b16 %v172, %v171
      %189 = vmatprep.subr.bf16.mxu0 0
      %190 = vmatpush1.bf16.msra.mxu0 %v180
      %191 = vmatprep.subr.bf16.mxu0 0
      %192 = vmatpush1.bf16.msra.mxu0 %v179
      %193 = vmatprep.subr.bf16.mxu0 0
      %194 = vmatpush1.bf16.msra.mxu0 %v178
      %195 = vmatprep.subr.bf16.mxu0 0
      %196 = vmatpush1.bf16.msra.mxu0 %v177
      %197 = vmatprep.subr.bf16.mxu0 0
      %198 = vmatpush1.bf16.msra.mxu0 %v176
      %199 = vmatprep.subr.bf16.mxu0 0
      %200 = vmatpush1.bf16.msra.mxu0 %v175
      %201 = vmatprep.subr.bf16.mxu0 0
      %202 = vmatpush1.bf16.msra.mxu0 %v174
      %203 = vmatprep.subr.bf16.mxu0 0
      %204 = vmatpush1.bf16.msra.mxu0 %v173
      %205 = vmatprep.subr.bf16.mxu0 0
      %206 = vmatpush2.bf16.msra.mxu0 0
      %207 = vmatprep.subr.bf16.mxu0 0
      %208 = vmatpush2.bf16.msra.mxu0 0
      %209 = vmatprep.subr.bf16.mxu0 0
      %210 = vmatpush2.bf16.msra.mxu0 0
      %211 = vmatprep.subr.bf16.mxu0 0
      %212 = vmatpush2.bf16.msra.mxu0 0
      %213 = vmatprep.subr.bf16.mxu0 0
      %214 = vmatpush2.bf16.msra.mxu0 0
      %215 = vmatprep.subr.bf16.mxu0 0
      %216 = vmatpush2.bf16.msra.mxu0 0
      %217 = vmatprep.subr.bf16.mxu0 0
      %218 = vmatpush2.bf16.msra.mxu0 0
      %219 = vmatprep.subr.bf16.mxu0 0
      %220 = vmatpush2.bf16.msra.mxu0 0
      %221 = vmatprep.mubr.bf16.mxu0 0
      %222 = vmatmul.mubr.bf16.gmra.mxu0 %v125
      %v223 = vpop.f32.mrf.mxu0
      %v224 = vadd.f32 0.0, %v223
      %v225 = vpop.f32.mrf.mxu0
      %v226 = vpop.f32.mrf.mxu0
      %v227 = vadd.f32 0.0, %v226
      %v228 = vpop.f32.mrf.mxu0
      %229 = vmatprep.mubr.bf16.mxu0 0
      %230 = vmatmul.mubr.bf16.gmra.mxu0 %v126
      %v231 = vpop.f32.mrf.mxu0
      %v232 = vadd.f32 0.0, %v231
      %v233 = vpop.f32.mrf.mxu0
      %v234 = vpop.f32.mrf.mxu0
      %v235 = vadd.f32 0.0, %v234
      %v236 = vpop.f32.mrf.mxu0
      %237 = vmatprep.mubr.bf16.mxu0 0
      %238 = vmatmul.mubr.bf16.gmra.mxu0 %v127
      %v239 = vpop.f32.mrf.mxu0
      %v240 = vadd.f32 0.0, %v239
      %v241 = vpop.f32.mrf.mxu0
      %v242 = vpop.f32.mrf.mxu0
      %v243 = vadd.f32 0.0, %v242
      %v244 = vpop.f32.mrf.mxu0
      %245 = vmatprep.mubr.bf16.mxu0 0
      %246 = vmatmul.mubr.bf16.gmra.mxu0 %v128
      %v247 = vpop.f32.mrf.mxu0
      %v248 = vadd.f32 0.0, %v247
      %v249 = vpop.f32.mrf.mxu0
      %v250 = vpop.f32.mrf.mxu0
      %v251 = vadd.f32 0.0, %v250
      %v252 = vpop.f32.mrf.mxu0
      %253 = vmatprep.mubr.bf16.mxu0 0
      %254 = vmatmul.mubr.bf16.gmra.mxu0 %v129
      %v255 = vpop.f32.mrf.mxu0
      %v256 = vadd.f32 0.0, %v255
      %v257 = vpop.f32.mrf.mxu0
      %v258 = vpop.f32.mrf.mxu0
      %v259 = vadd.f32 0.0, %v258
      %v260 = vpop.f32.mrf.mxu0
      %261 = vmatprep.mubr.bf16.mxu0 0
      %262 = vmatmul.mubr.bf16.gmra.mxu0 %v130
      %v263 = vpop.f32.mrf.mxu0
      %v264 = vadd.f32 0.0, %v263
      %v265 = vpop.f32.mrf.mxu0
      %v266 = vpop.f32.mrf.mxu0
      %v267 = vadd.f32 0.0, %v266
      %v268 = vpop.f32.mrf.mxu0
      %269 = vmatprep.mubr.bf16.mxu0 0
      %270 = vmatmul.mubr.bf16.gmra.mxu0 %v131
      %v271 = vpop.f32.mrf.mxu0
      %v272 = vadd.f32 0.0, %v271
      %v273 = vpop.f32.mrf.mxu0
      %v274 = vpop.f32.mrf.mxu0
      %v275 = vadd.f32 0.0, %v274
      %v276 = vpop.f32.mrf.mxu0
      %277 = vmatprep.mubr.bf16.mxu0 0
      %278 = vmatmul.mubr.bf16.gmra.mxu0 %v132
      %v279 = vpop.f32.mrf.mxu0
      %v280 = vadd.f32 0.0, %v279
      %v281 = vpop.f32.mrf.mxu0
      %v282 = vpop.f32.mrf.mxu0
      %v283 = vadd.f32 0.0, %v282
      %v284 = vpop.f32.mrf.mxu0
      %285 = vdwg.mxu0
      %v286 = vpack.c.bf16 %v227, %v224
      %v287 = vpack.c.bf16 %v235, %v232
      %v288 = vpack.c.bf16 %v243, %v240
      %v289 = vpack.c.bf16 %v251, %v248
      %v290 = vpack.c.bf16 %v259, %v256
      %v291 = vpack.c.bf16 %v267, %v264
      %v292 = vpack.c.bf16 %v275, %v272
      %v293 = vpack.c.bf16 %v283, %v280
      %v302 = vunpack.c.l.b16 %v286
      %v303 = vunpack.c.h.b16 %v286
      %v304 = vunpack.c.l.b16 %v287
      %v305 = vunpack.c.h.b16 %v287
      %v306 = vunpack.c.l.b16 %v288
      %v307 = vunpack.c.h.b16 %v288
      %v308 = vunpack.c.l.b16 %v289
      %v309 = vunpack.c.h.b16 %v289
      %v310 = vunpack.c.l.b16 %v290
      %v311 = vunpack.c.h.b16 %v290
      %v312 = vunpack.c.l.b16 %v291
      %v313 = vunpack.c.h.b16 %v291
      %v314 = vunpack.c.l.b16 %v292
      %v315 = vunpack.c.h.b16 %v292
      %v316 = vunpack.c.l.b16 %v293
      %v317 = vunpack.c.h.b16 %v293
      %v318 = vpack.c.b16 %v302, %v302
      %v319 = vpack.c.b16 %v303, %v303
      %v320 = vpack.c.b16 %v304, %v304
      %v321 = vpack.c.b16 %v305, %v305
      %v322 = vpack.c.b16 %v306, %v306
      %v323 = vpack.c.b16 %v307, %v307
      %v324 = vpack.c.b16 %v308, %v308
      %v325 = vpack.c.b16 %v309, %v309
      %v326 = vpack.c.b16 %v310, %v310
      %v327 = vpack.c.b16 %v311, %v311
      %v328 = vpack.c.b16 %v312, %v312
      %v329 = vpack.c.b16 %v313, %v313
      %v330 = vpack.c.b16 %v314, %v314
      %v331 = vpack.c.b16 %v315, %v315
      %v332 = vpack.c.b16 %v316, %v316
      %v333 = vpack.c.b16 %v317, %v317
      %350 = vst [vmem:[#allocation2] sm:$0xf] %v318
      %351 = vst [vmem:[#allocation2 + $0x4] sm:$0xf] %v319
      %352 = vst [vmem:[#allocation2 + $0x8] sm:$0xf] %v320
      %353 = vst [vmem:[#allocation2 + $0xc] sm:$0xf] %v321
      %354 = vst [vmem:[#allocation2 + $0x10] sm:$0xf] %v322
      %355 = vst [vmem:[#allocation2 + $0x14] sm:$0xf] %v323
      %356 = vst [vmem:[#allocation2 + $0x18] sm:$0xf] %v324
      %357 = vst [vmem:[#allocation2 + $0x1c] sm:$0xf] %v325
      %358 = vst [vmem:[#allocation2 + $0x20] sm:$0xf] %v326
      %359 = vst [vmem:[#allocation2 + $0x24] sm:$0xf] %v327
      %360 = vst [vmem:[#allocation2 + $0x28] sm:$0xf] %v328
      %361 = vst [vmem:[#allocation2 + $0x2c] sm:$0xf] %v329
      %362 = vst [vmem:[#allocation2 + $0x30] sm:$0xf] %v330
      %363 = vst [vmem:[#allocation2 + $0x34] sm:$0xf] %v331
      %364 = vst [vmem:[#allocation2 + $0x38] sm:$0xf] %v332
      %365 = vst [vmem:[#allocation2 + $0x3c] sm:$0xf] %v333
      %vm366 = vcmask 7168
      %367 = vst.msk [vmem:[#allocation3] sm:$0xff] %vm366, -inf
      %368 = vst.msk [vmem:[#allocation3 + $0x8] sm:$0xff] %vm366, -inf
      %369 = vst.msk [vmem:[#allocation3 + $0x10] sm:$0xff] %vm366, -inf
      %370 = vst.msk [vmem:[#allocation3 + $0x18] sm:$0xff] %vm366, -inf
      %371 = vst.msk [vmem:[#allocation3 + $0x20] sm:$0xff] %vm366, -inf
      %372 = vst.msk [vmem:[#allocation3 + $0x28] sm:$0xff] %vm366, -inf
      %373 = vst.msk [vmem:[#allocation3 + $0x30] sm:$0xff] %vm366, -inf
      %374 = vst.msk [vmem:[#allocation3 + $0x38] sm:$0xff] %vm366, -inf
      %375 = vst.msk [vmem:[#allocation3 + $0x40] sm:$0xff] %vm366, -inf
      %376 = vst.msk [vmem:[#allocation3 + $0x48] sm:$0xff] %vm366, -inf
      %377 = vst.msk [vmem:[#allocation3 + $0x50] sm:$0xff] %vm366, -inf
      %378 = vst.msk [vmem:[#allocation3 + $0x58] sm:$0xff] %vm366, -inf
      %379 = vst.msk [vmem:[#allocation3 + $0x60] sm:$0xff] %vm366, -inf
      %380 = vst.msk [vmem:[#allocation3 + $0x68] sm:$0xff] %vm366, -inf
      %381 = vst.msk [vmem:[#allocation3 + $0x70] sm:$0xff] %vm366, -inf
      %382 = vst.msk [vmem:[#allocation3 + $0x78] sm:$0xff] %vm366, -inf
      %383 = vst.msk [vmem:[#allocation4] sm:$0xff] %vm366, 0.0
      %384 = vst.msk [vmem:[#allocation4 + $0x8] sm:$0xff] %vm366, 0.0
      %385 = vst.msk [vmem:[#allocation4 + $0x10] sm:$0xff] %vm366, 0.0
      %386 = vst.msk [vmem:[#allocation4 + $0x18] sm:$0xff] %vm366, 0.0
      %387 = vst.msk [vmem:[#allocation4 + $0x20] sm:$0xff] %vm366, 0.0
      %388 = vst.msk [vmem:[#allocation4 + $0x28] sm:$0xff] %vm366, 0.0
      %389 = vst.msk [vmem:[#allocation4 + $0x30] sm:$0xff] %vm366, 0.0
      %390 = vst.msk [vmem:[#allocation4 + $0x38] sm:$0xff] %vm366, 0.0
      %391 = vst.msk [vmem:[#allocation4 + $0x40] sm:$0xff] %vm366, 0.0
      %392 = vst.msk [vmem:[#allocation4 + $0x48] sm:$0xff] %vm366, 0.0
      %393 = vst.msk [vmem:[#allocation4 + $0x50] sm:$0xff] %vm366, 0.0
      %394 = vst.msk [vmem:[#allocation4 + $0x58] sm:$0xff] %vm366, 0.0
      %395 = vst.msk [vmem:[#allocation4 + $0x60] sm:$0xff] %vm366, 0.0
      %396 = vst.msk [vmem:[#allocation4 + $0x68] sm:$0xff] %vm366, 0.0
      %397 = vst.msk [vmem:[#allocation4 + $0x70] sm:$0xff] %vm366, 0.0
      %398 = vst.msk [vmem:[#allocation4 + $0x78] sm:$0xff] %vm366, 0.0
      %399 = vst [vmem:[#allocation5] sm:$0xff] 0.0
      %400 = vst [vmem:[#allocation5 + $0x8] sm:$0xff] 0.0
      %401 = vst [vmem:[#allocation5 + $0x10] sm:$0xff] 0.0
      %402 = vst [vmem:[#allocation5 + $0x18] sm:$0xff] 0.0
      %403 = vst [vmem:[#allocation5 + $0x20] sm:$0xff] 0.0
      %404 = vst [vmem:[#allocation5 + $0x28] sm:$0xff] 0.0
      %405 = vst [vmem:[#allocation5 + $0x30] sm:$0xff] 0.0
      %406 = vst [vmem:[#allocation5 + $0x38] sm:$0xff] 0.0
      %407 = vst [vmem:[#allocation5 + $0x40] sm:$0xff] 0.0
      %408 = vst [vmem:[#allocation5 + $0x48] sm:$0xff] 0.0
      %409 = vst [vmem:[#allocation5 + $0x50] sm:$0xff] 0.0
      %410 = vst [vmem:[#allocation5 + $0x58] sm:$0xff] 0.0
      %411 = vst [vmem:[#allocation5 + $0x60] sm:$0xff] 0.0
      %412 = vst [vmem:[#allocation5 + $0x68] sm:$0xff] 0.0
      %413 = vst [vmem:[#allocation5 + $0x70] sm:$0xff] 0.0
      %414 = vst [vmem:[#allocation5 + $0x78] sm:$0xff] 0.0
    $region29: #{tpu_custom_call.1} parent=1 // pred_fallthru
      _
    %v415 = vld [vmem:[#allocation9] sm:$0xf]
    %v416 = vld [vmem:[#allocation9 + $0x4] sm:$0xf]
    %v417 = vld [vmem:[#allocation9 + $0x8] sm:$0xf]
    %v418 = vld [vmem:[#allocation9 + $0xc] sm:$0xf]
    %v419 = vld [vmem:[#allocation9 + $0x10] sm:$0xf]
    %v420 = vld [vmem:[#allocation9 + $0x14] sm:$0xf]
    %v421 = vld [vmem:[#allocation9 + $0x18] sm:$0xf]
    %v422 = vld [vmem:[#allocation9 + $0x1c] sm:$0xf]
    %v423 = vld [vmem:[#allocation9 + $0x20] sm:$0xf]
    %v424 = vld [vmem:[#allocation9 + $0x24] sm:$0xf]
    %v425 = vld [vmem:[#allocation9 + $0x28] sm:$0xf]
    %v426 = vld [vmem:[#allocation9 + $0x2c] sm:$0xf]
    %v427 = vld [vmem:[#allocation9 + $0x30] sm:$0xf]
    %v428 = vld [vmem:[#allocation9 + $0x34] sm:$0xf]
    %v429 = vld [vmem:[#allocation9 + $0x38] sm:$0xf]
    %v430 = vld [vmem:[#allocation9 + $0x3c] sm:$0xf]
    %v431 = vld [vmem:[#allocation11 + $0x4] sm:$0xf]
    %v432 = vld [vmem:[#allocation11 + $0x10] sm:$0xf]
    %v433 = vld [vmem:[#allocation11 + $0x1c] sm:$0xf]
    %v434 = vld [vmem:[#allocation11 + $0x28] sm:$0xf]
    %v435 = vld [vmem:[#allocation11 + $0x34] sm:$0xf]
    %v436 = vld [vmem:[#allocation11 + $0x40] sm:$0xf]
    %v437 = vld [vmem:[#allocation11 + $0x4c] sm:$0xf]
    %v438 = vld [vmem:[#allocation11 + $0x58] sm:$0xf]
    %v439 = vld [vmem:[#allocation11 + $0x64] sm:$0xf]
    %v440 = vld [vmem:[#allocation11 + $0x70] sm:$0xf]
    %v441 = vld [vmem:[#allocation11 + $0x7c] sm:$0xf]
    %v442 = vld [vmem:[#allocation11 + $0x88] sm:$0xf]
    %v443 = vld [vmem:[#allocation11 + $0x94] sm:$0xf]
    %v444 = vld [vmem:[#allocation11 + $0xa0] sm:$0xf]
    %v445 = vld [vmem:[#allocation11 + $0xac] sm:$0xf]
    %v446 = vld [vmem:[#allocation11 + $0xb8] sm:$0xf]
    %v463 = vunpack.c.l.b16 %v415
    %v464 = vunpack.c.l.b16 %v416
    %v465 = vunpack.c.l.b16 %v417
    %v466 = vunpack.c.l.b16 %v418
    %v467 = vunpack.c.l.b16 %v419
    %v468 = vunpack.c.l.b16 %v420
    %v469 = vunpack.c.l.b16 %v421
    %v470 = vunpack.c.l.b16 %v422
    %v471 = vunpack.c.l.b16 %v423
    %v472 = vunpack.c.l.b16 %v424
    %v473 = vunpack.c.l.b16 %v425
    %v474 = vunpack.c.l.b16 %v426
    %v475 = vunpack.c.l.b16 %v427
    %v476 = vunpack.c.l.b16 %v428
    %v477 = vunpack.c.l.b16 %v429
    %v478 = vunpack.c.l.b16 %v430
    %v479 = vpack.c.b16 %v464, %v463
    %v480 = vpack.c.b16 %v466, %v465
    %v481 = vpack.c.b16 %v468, %v467
    %v482 = vpack.c.b16 %v470, %v469
    %v483 = vpack.c.b16 %v472, %v471
    %v484 = vpack.c.b16 %v474, %v473
    %v485 = vpack.c.b16 %v476, %v475
    %v486 = vpack.c.b16 %v478, %v477
    %v511 = vunpack.c.l.b16 %v431
    %v512 = vunpack.c.l.b16 %v432
    %v513 = vunpack.c.l.b16 %v433
    %v514 = vunpack.c.l.b16 %v434
    %v515 = vunpack.c.l.b16 %v435
    %v516 = vunpack.c.l.b16 %v436
    %v517 = vunpack.c.l.b16 %v437
    %v518 = vunpack.c.l.b16 %v438
    %v519 = vunpack.c.l.b16 %v439
    %v520 = vunpack.c.l.b16 %v440
    %v521 = vunpack.c.l.b16 %v441
    %v522 = vunpack.c.l.b16 %v442
    %v523 = vunpack.c.l.b16 %v443
    %v524 = vunpack.c.l.b16 %v444
    %v525 = vunpack.c.l.b16 %v445
    %v526 = vunpack.c.l.b16 %v446
    %v527 = vpack.c.b16 %v512, %v511
    %v528 = vpack.c.b16 %v514, %v513
    %v529 = vpack.c.b16 %v516, %v515
    %v530 = vpack.c.b16 %v518, %v517
    %v531 = vpack.c.b16 %v520, %v519
    %v532 = vpack.c.b16 %v522, %v521
    %v533 = vpack.c.b16 %v524, %v523
    %v534 = vpack.c.b16 %v526, %v525
    %543 = vmatprep.subr.bf16.mxu0 0
    %544 = vmatpush1.bf16.msra.mxu0 %v534
    %545 = vmatprep.subr.bf16.mxu0 0
    %546 = vmatpush1.bf16.msra.mxu0 %v533
    %547 = vmatprep.subr.bf16.mxu0 0
    %548 = vmatpush1.bf16.msra.mxu0 %v532
    %549 = vmatprep.subr.bf16.mxu0 0
    %550 = vmatpush1.bf16.msra.mxu0 %v531
    %551 = vmatprep.subr.bf16.mxu0 0
    %552 = vmatpush1.bf16.msra.mxu0 %v530
    %553 = vmatprep.subr.bf16.mxu0 0
    %554 = vmatpush1.bf16.msra.mxu0 %v529
    %555 = vmatprep.subr.bf16.mxu0 0
    %556 = vmatpush1.bf16.msra.mxu0 %v528
    %557 = vmatprep.subr.bf16.mxu0 0
    %558 = vmatpush1.bf16.msra.mxu0 %v527
    %559 = vmatprep.subr.bf16.mxu0 0
    %560 = vmatpush2.bf16.msra.mxu0 0
    %561 = vmatprep.subr.bf16.mxu0 0
    %562 = vmatpush2.bf16.msra.mxu0 0
    %563 = vmatprep.subr.bf16.mxu0 0
    %564 = vmatpush2.bf16.msra.mxu0 0
    %565 = vmatprep.subr.bf16.mxu0 0
    %566 = vmatpush2.bf16.msra.mxu0 0
    %567 = vmatprep.subr.bf16.mxu0 0
    %568 = vmatpush2.bf16.msra.mxu0 0
    %569 = vmatprep.subr.bf16.mxu0 0
    %570 = vmatpush2.bf16.msra.mxu0 0
    %571 = vmatprep.subr.bf16.mxu0 0
    %572 = vmatpush2.bf16.msra.mxu0 0
    %573 = vmatprep.subr.bf16.mxu0 0
    %574 = vmatpush2.bf16.msra.mxu0 0
    %575 = vmatprep.mubr.bf16.mxu0 0
    %576 = vmatmul.mubr.bf16.gmra.mxu0 %v479
    %v577 = vpop.f32.mrf.mxu0
    %v578 = vadd.f32 0.0, %v577
    %v579 = vpop.f32.mrf.mxu0
    %v580 = vpop.f32.mrf.mxu0
    %v581 = vadd.f32 0.0, %v580
    %v582 = vpop.f32.mrf.mxu0
    %583 = vmatprep.mubr.bf16.mxu0 0
    %584 = vmatmul.mubr.bf16.gmra.mxu0 %v480
    %v585 = vpop.f32.mrf.mxu0
    %v586 = vadd.f32 0.0, %v585
    %v587 = vpop.f32.mrf.mxu0
    %v588 = vpop.f32.mrf.mxu0
    %v589 = vadd.f32 0.0, %v588
    %v590 = vpop.f32.mrf.mxu0
    %591 = vmatprep.mubr.bf16.mxu0 0
    %592 = vmatmul.mubr.bf16.gmra.mxu0 %v481
    %v593 = vpop.f32.mrf.mxu0
    %v594 = vadd.f32 0.0, %v593
    %v595 = vpop.f32.mrf.mxu0
    %v596 = vpop.f32.mrf.mxu0
    %v597 = vadd.f32 0.0, %v596
    %v598 = vpop.f32.mrf.mxu0
    %599 = vmatprep.mubr.bf16.mxu0 0
    %600 = vmatmul.mubr.bf16.gmra.mxu0 %v482
    %v601 = vpop.f32.mrf.mxu0
    %v602 = vadd.f32 0.0, %v601
    %v603 = vpop.f32.mrf.mxu0
    %v604 = vpop.f32.mrf.mxu0
    %v605 = vadd.f32 0.0, %v604
    %v606 = vpop.f32.mrf.mxu0
    %607 = vmatprep.mubr.bf16.mxu0 0
    %608 = vmatmul.mubr.bf16.gmra.mxu0 %v483
    %v609 = vpop.f32.mrf.mxu0
    %v610 = vadd.f32 0.0, %v609
    %v611 = vpop.f32.mrf.mxu0
    %v612 = vpop.f32.mrf.mxu0
    %v613 = vadd.f32 0.0, %v612
    %v614 = vpop.f32.mrf.mxu0
    %615 = vmatprep.mubr.bf16.mxu0 0
    %616 = vmatmul.mubr.bf16.gmra.mxu0 %v484
    %v617 = vpop.f32.mrf.mxu0
    %v618 = vadd.f32 0.0, %v617
    %v619 = vpop.f32.mrf.mxu0
    %v620 = vpop.f32.mrf.mxu0
    %v621 = vadd.f32 0.0, %v620
    %v622 = vpop.f32.mrf.mxu0
    %623 = vmatprep.mubr.bf16.mxu0 0
    %624 = vmatmul.mubr.bf16.gmra.mxu0 %v485
    %v625 = vpop.f32.mrf.mxu0
    %v626 = vadd.f32 0.0, %v625
    %v627 = vpop.f32.mrf.mxu0
    %v628 = vpop.f32.mrf.mxu0
    %v629 = vadd.f32 0.0, %v628
    %v630 = vpop.f32.mrf.mxu0
    %631 = vmatprep.mubr.bf16.mxu0 0
    %632 = vmatmul.mubr.bf16.gmra.mxu0 %v486
    %v633 = vpop.f32.mrf.mxu0
    %v634 = vadd.f32 0.0, %v633
    %v635 = vpop.f32.mrf.mxu0
    %v636 = vpop.f32.mrf.mxu0
    %v637 = vadd.f32 0.0, %v636
    %v638 = vpop.f32.mrf.mxu0
    %639 = vdwg.mxu0
    %v640 = vpack.c.bf16 %v581, %v578
    %v641 = vpack.c.bf16 %v589, %v586
    %v642 = vpack.c.bf16 %v597, %v594
    %v643 = vpack.c.bf16 %v605, %v602
    %v644 = vpack.c.bf16 %v613, %v610
    %v645 = vpack.c.bf16 %v621, %v618
    %v646 = vpack.c.bf16 %v629, %v626
    %v647 = vpack.c.bf16 %v637, %v634
    %v648 = vld [vmem:[#allocation11 + $0x8] sm:$0xf]
    %v649 = vld [vmem:[#allocation11 + $0x14] sm:$0xf]
    %v650 = vld [vmem:[#allocation11 + $0x20] sm:$0xf]
    %v651 = vld [vmem:[#allocation11 + $0x2c] sm:$0xf]
    %v652 = vld [vmem:[#allocation11 + $0x38] sm:$0xf]
    %v653 = vld [vmem:[#allocation11 + $0x44] sm:$0xf]
    %v654 = vld [vmem:[#allocation11 + $0x50] sm:$0xf]
    %v655 = vld [vmem:[#allocation11 + $0x5c] sm:$0xf]
    %v656 = vld [vmem:[#allocation11 + $0x68] sm:$0xf]
    %v657 = vld [vmem:[#allocation11 + $0x74] sm:$0xf]
    %v658 = vld [vmem:[#allocation11 + $0x80] sm:$0xf]
    %v659 = vld [vmem:[#allocation11 + $0x8c] sm:$0xf]
    %v660 = vld [vmem:[#allocation11 + $0x98] sm:$0xf]
    %v661 = vld [vmem:[#allocation11 + $0xa4] sm:$0xf]
    %v662 = vld [vmem:[#allocation11 + $0xb0] sm:$0xf]
    %v663 = vld [vmem:[#allocation11 + $0xbc] sm:$0xf]
    %v680 = vunpack.c.l.b16 %v648
    %v681 = vunpack.c.l.b16 %v649
    %v682 = vunpack.c.l.b16 %v650
    %v683 = vunpack.c.l.b16 %v651
    %v684 = vunpack.c.l.b16 %v652
    %v685 = vunpack.c.l.b16 %v653
    %v686 = vunpack.c.l.b16 %v654
    %v687 = vunpack.c.l.b16 %v655
    %v688 = vunpack.c.l.b16 %v656
    %v689 = vunpack.c.l.b16 %v657
    %v690 = vunpack.c.l.b16 %v658
    %v691 = vunpack.c.l.b16 %v659
    %v692 = vunpack.c.l.b16 %v660
    %v693 = vunpack.c.l.b16 %v661
    %v694 = vunpack.c.l.b16 %v662
    %v695 = vunpack.c.l.b16 %v663
    %v696 = vpack.c.b16 %v681, %v680
    %v697 = vpack.c.b16 %v683, %v682
    %v698 = vpack.c.b16 %v685, %v684
    %v699 = vpack.c.b16 %v687, %v686
    %v700 = vpack.c.b16 %v689, %v688
    %v701 = vpack.c.b16 %v691, %v690
    %v702 = vpack.c.b16 %v693, %v692
    %v703 = vpack.c.b16 %v695, %v694
    %712 = vmatprep.subr.bf16.mxu0 0
    %713 = vmatpush1.bf16.msra.mxu0 %v703
    %714 = vmatprep.subr.bf16.mxu0 0
    %715 = vmatpush1.bf16.msra.mxu0 %v702
    %716 = vmatprep.subr.bf16.mxu0 0
    %717 = vmatpush1.bf16.msra.mxu0 %v701
    %718 = vmatprep.subr.bf16.mxu0 0
    %719 = vmatpush1.bf16.msra.mxu0 %v700
    %720 = vmatprep.subr.bf16.mxu0 0
    %721 = vmatpush1.bf16.msra.mxu0 %v699
    %722 = vmatprep.subr.bf16.mxu0 0
    %723 = vmatpush1.bf16.msra.mxu0 %v698
    %724 = vmatprep.subr.bf16.mxu0 0
    %725 = vmatpush1.bf16.msra.mxu0 %v697
    %726 = vmatprep.subr.bf16.mxu0 0
    %727 = vmatpush1.bf16.msra.mxu0 %v696
    %728 = vmatprep.subr.bf16.mxu0 0
    %729 = vmatpush2.bf16.msra.mxu0 0
    %730 = vmatprep.subr.bf16.mxu0 0
    %731 = vmatpush2.bf16.msra.mxu0 0
    %732 = vmatprep.subr.bf16.mxu0 0
    %733 = vmatpush2.bf16.msra.mxu0 0
    %734 = vmatprep.subr.bf16.mxu0 0
    %735 = vmatpush2.bf16.msra.mxu0 0
    %736 = vmatprep.subr.bf16.mxu0 0
    %737 = vmatpush2.bf16.msra.mxu0 0
    %738 = vmatprep.subr.bf16.mxu0 0
    %739 = vmatpush2.bf16.msra.mxu0 0
    %740 = vmatprep.subr.bf16.mxu0 0
    %741 = vmatpush2.bf16.msra.mxu0 0
    %742 = vmatprep.subr.bf16.mxu0 0
    %743 = vmatpush2.bf16.msra.mxu0 0
    %744 = vmatprep.mubr.bf16.mxu0 0
    %745 = vmatmul.mubr.bf16.gmra.mxu0 %v479
    %v746 = vpop.f32.mrf.mxu0
    %v747 = vadd.f32 0.0, %v746
    %v748 = vpop.f32.mrf.mxu0
    %v749 = vpop.f32.mrf.mxu0
    %v750 = vadd.f32 0.0, %v749
    %v751 = vpop.f32.mrf.mxu0
    %752 = vmatprep.mubr.bf16.mxu0 0
    %753 = vmatmul.mubr.bf16.gmra.mxu0 %v480
    %v754 = vpop.f32.mrf.mxu0
    %v755 = vadd.f32 0.0, %v754
    %v756 = vpop.f32.mrf.mxu0
    %v757 = vpop.f32.mrf.mxu0
    %v758 = vadd.f32 0.0, %v757
    %v759 = vpop.f32.mrf.mxu0
    %760 = vmatprep.mubr.bf16.mxu0 0
    %761 = vmatmul.mubr.bf16.gmra.mxu0 %v481
    %v762 = vpop.f32.mrf.mxu0
    %v763 = vadd.f32 0.0, %v762
    %v764 = vpop.f32.mrf.mxu0
    %v765 = vpop.f32.mrf.mxu0
    %v766 = vadd.f32 0.0, %v765
    %v767 = vpop.f32.mrf.mxu0
    %768 = vmatprep.mubr.bf16.mxu0 0
    %769 = vmatmul.mubr.bf16.gmra.mxu0 %v482
    %v770 = vpop.f32.mrf.mxu0
    %v771 = vadd.f32 0.0, %v770
    %v772 = vpop.f32.mrf.mxu0
    %v773 = vpop.f32.mrf.mxu0
    %v774 = vadd.f32 0.0, %v773
    %v775 = vpop.f32.mrf.mxu0
    %776 = vmatprep.mubr.bf16.mxu0 0
    %777 = vmatmul.mubr.bf16.gmra.mxu0 %v483
    %v778 = vpop.f32.mrf.mxu0
    %v779 = vadd.f32 0.0, %v778
    %v780 = vpop.f32.mrf.mxu0
    %v781 = vpop.f32.mrf.mxu0
    %v782 = vadd.f32 0.0, %v781
    %v783 = vpop.f32.mrf.mxu0
    %784 = vmatprep.mubr.bf16.mxu0 0
    %785 = vmatmul.mubr.bf16.gmra.mxu0 %v484
    %v786 = vpop.f32.mrf.mxu0
    %v787 = vadd.f32 0.0, %v786
    %v788 = vpop.f32.mrf.mxu0
    %v789 = vpop.f32.mrf.mxu0
    %v790 = vadd.f32 0.0, %v789
    %v791 = vpop.f32.mrf.mxu0
    %792 = vmatprep.mubr.bf16.mxu0 0
    %793 = vmatmul.mubr.bf16.gmra.mxu0 %v485
    %v794 = vpop.f32.mrf.mxu0
    %v795 = vadd.f32 0.0, %v794
    %v796 = vpop.f32.mrf.mxu0
    %v797 = vpop.f32.mrf.mxu0
    %v798 = vadd.f32 0.0, %v797
    %v799 = vpop.f32.mrf.mxu0
    %800 = vmatprep.mubr.bf16.mxu0 0
    %801 = vmatmul.mubr.bf16.gmra.mxu0 %v486
    %v802 = vpop.f32.mrf.mxu0
    %v803 = vadd.f32 0.0, %v802
    %v804 = vpop.f32.mrf.mxu0
    %v805 = vpop.f32.mrf.mxu0
    %v806 = vadd.f32 0.0, %v805
    %v807 = vpop.f32.mrf.mxu0
    %808 = vdwg.mxu0
    %v809 = vpack.c.bf16 %v750, %v747
    %v810 = vpack.c.bf16 %v758, %v755
    %v811 = vpack.c.bf16 %v766, %v763
    %v812 = vpack.c.bf16 %v774, %v771
    %v813 = vpack.c.bf16 %v782, %v779
    %v814 = vpack.c.bf16 %v790, %v787
    %v815 = vpack.c.bf16 %v798, %v795
    %v816 = vpack.c.bf16 %v806, %v803
    %v817 = vld [vmem:[#allocation2] sm:$0xf]
    %v818 = vld [vmem:[#allocation2 + $0x4] sm:$0xf]
    %v819 = vld [vmem:[#allocation2 + $0x8] sm:$0xf]
    %v820 = vld [vmem:[#allocation2 + $0xc] sm:$0xf]
    %v821 = vld [vmem:[#allocation2 + $0x10] sm:$0xf]
    %v822 = vld [vmem:[#allocation2 + $0x14] sm:$0xf]
    %v823 = vld [vmem:[#allocation2 + $0x18] sm:$0xf]
    %v824 = vld [vmem:[#allocation2 + $0x1c] sm:$0xf]
    %v825 = vld [vmem:[#allocation2 + $0x20] sm:$0xf]
    %v826 = vld [vmem:[#allocation2 + $0x24] sm:$0xf]
    %v827 = vld [vmem:[#allocation2 + $0x28] sm:$0xf]
    %v828 = vld [vmem:[#allocation2 + $0x2c] sm:$0xf]
    %v829 = vld [vmem:[#allocation2 + $0x30] sm:$0xf]
    %v830 = vld [vmem:[#allocation2 + $0x34] sm:$0xf]
    %v831 = vld [vmem:[#allocation2 + $0x38] sm:$0xf]
    %v832 = vld [vmem:[#allocation2 + $0x3c] sm:$0xf]
    %v849 = vunpack.c.l.b16 %v817
    %v850 = vunpack.c.l.b16 %v818
    %v851 = vunpack.c.l.b16 %v819
    %v852 = vunpack.c.l.b16 %v820
    %v853 = vunpack.c.l.b16 %v821
    %v854 = vunpack.c.l.b16 %v822
    %v855 = vunpack.c.l.b16 %v823
    %v856 = vunpack.c.l.b16 %v824
    %v857 = vunpack.c.l.b16 %v825
    %v858 = vunpack.c.l.b16 %v826
    %v859 = vunpack.c.l.b16 %v827
    %v860 = vunpack.c.l.b16 %v828
    %v861 = vunpack.c.l.b16 %v829
    %v862 = vunpack.c.l.b16 %v830
    %v863 = vunpack.c.l.b16 %v831
    %v864 = vunpack.c.l.b16 %v832
    %v865 = vpack.c.b16 %v850, %v849
    %v866 = vpack.c.b16 %v852, %v851
    %v867 = vpack.c.b16 %v854, %v853
    %v868 = vpack.c.b16 %v856, %v855
    %v869 = vpack.c.b16 %v858, %v857
    %v870 = vpack.c.b16 %v860, %v859
    %v871 = vpack.c.b16 %v862, %v861
    %v872 = vpack.c.b16 %v864, %v863
    %881 = vmatprep.subr.bf16.mxu0 0
    %882 = vmatpush1.bf16.xpose.msra.mxu0 %v647
    %883 = vmatprep.subr.bf16.mxu0 0
    %884 = vmatpush1.bf16.xpose.msra.mxu0 %v646
    %885 = vmatprep.subr.bf16.mxu0 0
    %886 = vmatpush1.bf16.xpose.msra.mxu0 %v645
    %887 = vmatprep.subr.bf16.mxu0 0
    %888 = vmatpush1.bf16.xpose.msra.mxu0 %v644
    %889 = vmatprep.subr.bf16.mxu0 0
    %890 = vmatpush1.bf16.xpose.msra.mxu0 %v643
    %891 = vmatprep.subr.bf16.mxu0 0
    %892 = vmatpush1.bf16.xpose.msra.mxu0 %v642
    %893 = vmatprep.subr.bf16.mxu0 0
    %894 = vmatpush1.bf16.xpose.msra.mxu0 %v641
    %895 = vmatprep.subr.bf16.mxu0 0
    %896 = vmatpush1.bf16.xpose.msra.mxu0 %v640
    %897 = vmatprep.subr.bf16.mxu0 0
    %898 = vmatpush2.bf16.xpose.msra.mxu0 0
    %899 = vmatprep.subr.bf16.mxu0 0
    %900 = vmatpush2.bf16.xpose.msra.mxu0 0
    %901 = vmatprep.subr.bf16.mxu0 0
    %902 = vmatpush2.bf16.xpose.msra.mxu0 0
    %903 = vmatprep.subr.bf16.mxu0 0
    %904 = vmatpush2.bf16.xpose.msra.mxu0 0
    %905 = vmatprep.subr.bf16.mxu0 0
    %906 = vmatpush2.bf16.xpose.msra.mxu0 0
    %907 = vmatprep.subr.bf16.mxu0 0
    %908 = vmatpush2.bf16.xpose.msra.mxu0 0
    %909 = vmatprep.subr.bf16.mxu0 0
    %910 = vmatpush2.bf16.xpose.msra.mxu0 0
    %911 = vmatprep.subr.bf16.mxu0 0
    %912 = vmatpush2.bf16.xpose.msra.mxu0 0
    %913 = vmatprep.mubr.bf16.mxu0 0
    %914 = vmatmul.mubr.bf16.gmra.mxu0 %v865
    %v915 = vpop.f32.mrf.mxu0
    %v916 = vadd.f32 0.0, %v915
    %v917 = vpop.f32.mrf.mxu0
    %v918 = vpop.f32.mrf.mxu0
    %v919 = vadd.f32 0.0, %v918
    %v920 = vpop.f32.mrf.mxu0
    %921 = vmatprep.mubr.bf16.mxu0 0
    %922 = vmatmul.mubr.bf16.gmra.mxu0 %v866
    %v923 = vpop.f32.mrf.mxu0
    %v924 = vadd.f32 0.0, %v923
    %v925 = vpop.f32.mrf.mxu0
    %v926 = vpop.f32.mrf.mxu0
    %v927 = vadd.f32 0.0, %v926
    %v928 = vpop.f32.mrf.mxu0
    %929 = vmatprep.mubr.bf16.mxu0 0
    %930 = vmatmul.mubr.bf16.gmra.mxu0 %v867
    %v931 = vpop.f32.mrf.mxu0
    %v932 = vadd.f32 0.0, %v931
    %v933 = vpop.f32.mrf.mxu0
    %v934 = vpop.f32.mrf.mxu0
    %v935 = vadd.f32 0.0, %v934
    %v936 = vpop.f32.mrf.mxu0
    %937 = vmatprep.mubr.bf16.mxu0 0
    %938 = vmatmul.mubr.bf16.gmra.mxu0 %v868
    %v939 = vpop.f32.mrf.mxu0
    %v940 = vadd.f32 0.0, %v939
    %v941 = vpop.f32.mrf.mxu0
    %v942 = vpop.f32.mrf.mxu0
    %v943 = vadd.f32 0.0, %v942
    %v944 = vpop.f32.mrf.mxu0
    %945 = vmatprep.mubr.bf16.mxu0 0
    %946 = vmatmul.mubr.bf16.gmra.mxu0 %v869
    %v947 = vpop.f32.mrf.mxu0
    %v948 = vadd.f32 0.0, %v947
    %v949 = vpop.f32.mrf.mxu0
    %v950 = vpop.f32.mrf.mxu0
    %v951 = vadd.f32 0.0, %v950
    %v952 = vpop.f32.mrf.mxu0
    %953 = vmatprep.mubr.bf16.mxu0 0
    %954 = vmatmul.mubr.bf16.gmra.mxu0 %v870
    %v955 = vpop.f32.mrf.mxu0
    %v956 = vadd.f32 0.0, %v955
    %v957 = vpop.f32.mrf.mxu0
    %v958 = vpop.f32.mrf.mxu0
    %v959 = vadd.f32 0.0, %v958
    %v960 = vpop.f32.mrf.mxu0
    %961 = vmatprep.mubr.bf16.mxu0 0
    %962 = vmatmul.mubr.bf16.gmra.mxu0 %v871
    %v963 = vpop.f32.mrf.mxu0
    %v964 = vadd.f32 0.0, %v963
    %v965 = vpop.f32.mrf.mxu0
    %v966 = vpop.f32.mrf.mxu0
    %v967 = vadd.f32 0.0, %v966
    %v968 = vpop.f32.mrf.mxu0
    %969 = vmatprep.mubr.bf16.mxu0 0
    %970 = vmatmul.mubr.bf16.gmra.mxu0 %v872
    %v971 = vpop.f32.mrf.mxu0
    %v972 = vadd.f32 0.0, %v971
    %v973 = vpop.f32.mrf.mxu0
    %v974 = vpop.f32.mrf.mxu0
    %v975 = vadd.f32 0.0, %v974
    %v976 = vpop.f32.mrf.mxu0
    %977 = vdwg.mxu0
    %v978 = vld [vmem:[#allocation3] sm:$0xff]
    %v979 = vld [vmem:[#allocation3 + $0x8] sm:$0xff]
    %v980 = vld [vmem:[#allocation3 + $0x10] sm:$0xff]
    %v981 = vld [vmem:[#allocation3 + $0x18] sm:$0xff]
    %v982 = vld [vmem:[#allocation3 + $0x20] sm:$0xff]
    %v983 = vld [vmem:[#allocation3 + $0x28] sm:$0xff]
    %v984 = vld [vmem:[#allocation3 + $0x30] sm:$0xff]
    %v985 = vld [vmem:[#allocation3 + $0x38] sm:$0xff]
    %v986 = vld [vmem:[#allocation3 + $0x40] sm:$0xff]
    %v987 = vld [vmem:[#allocation3 + $0x48] sm:$0xff]
    %v988 = vld [vmem:[#allocation3 + $0x50] sm:$0xff]
    %v989 = vld [vmem:[#allocation3 + $0x58] sm:$0xff]
    %v990 = vld [vmem:[#allocation3 + $0x60] sm:$0xff]
    %v991 = vld [vmem:[#allocation3 + $0x68] sm:$0xff]
    %v992 = vld [vmem:[#allocation3 + $0x70] sm:$0xff]
    %v993 = vld [vmem:[#allocation3 + $0x78] sm:$0xff]
    %994 = vmax.xlane.f32.xlu0 %v916
    %v995 = vpop.xlane.xlu0 %994
    %996 = vmax.xlane.f32.xlu0 %v919
    %v997 = vpop.xlane.xlu0 %996
    %998 = vmax.xlane.f32.xlu0 %v924
    %v999 = vpop.xlane.xlu0 %998
    %1000 = vmax.xlane.f32.xlu0 %v927
    %v1001 = vpop.xlane.xlu0 %1000
    %1002 = vmax.xlane.f32.xlu0 %v932
    %v1003 = vpop.xlane.xlu0 %1002
    %1004 = vmax.xlane.f32.xlu0 %v935
    %v1005 = vpop.xlane.xlu0 %1004
    %1006 = vmax.xlane.f32.xlu0 %v940
    %v1007 = vpop.xlane.xlu0 %1006
    %1008 = vmax.xlane.f32.xlu0 %v943
    %v1009 = vpop.xlane.xlu0 %1008
    %1010 = vmax.xlane.f32.xlu0 %v948
    %v1011 = vpop.xlane.xlu0 %1010
    %1012 = vmax.xlane.f32.xlu0 %v951
    %v1013 = vpop.xlane.xlu0 %1012
    %1014 = vmax.xlane.f32.xlu0 %v956
    %v1015 = vpop.xlane.xlu0 %1014
    %1016 = vmax.xlane.f32.xlu0 %v959
    %v1017 = vpop.xlane.xlu0 %1016
    %1018 = vmax.xlane.f32.xlu0 %v964
    %v1019 = vpop.xlane.xlu0 %1018
    %1020 = vmax.xlane.f32.xlu0 %v967
    %v1021 = vpop.xlane.xlu0 %1020
    %1022 = vmax.xlane.f32.xlu0 %v972
    %v1023 = vpop.xlane.xlu0 %1022
    %1024 = vmax.xlane.f32.xlu0 %v975
    %v1025 = vpop.xlane.xlu0 %1024
    %v1026 = vmax.f32 %v978, %v995
    %v1027 = vmax.f32 %v979, %v997
    %v1028 = vmax.f32 %v980, %v999
    %v1029 = vmax.f32 %v981, %v1001
    %v1030 = vmax.f32 %v982, %v1003
    %v1031 = vmax.f32 %v983, %v1005
    %v1032 = vmax.f32 %v984, %v1007
    %v1033 = vmax.f32 %v985, %v1009
    %v1034 = vmax.f32 %v986, %v1011
    %v1035 = vmax.f32 %v987, %v1013
    %v1036 = vmax.f32 %v988, %v1015
    %v1037 = vmax.f32 %v989, %v1017
    %v1038 = vmax.f32 %v990, %v1019
    %v1039 = vmax.f32 %v991, %v1021
    %v1040 = vmax.f32 %v992, %v1023
    %v1041 = vmax.f32 %v993, %v1025
    %1043 = vset.pattern.permute.xlu0 0
    %1044 = vperm.xlu0 %1043, %v1026
    %v1045 = vpop.permute.xlu0 %1044
    %1048 = vset.pattern.permute.xlu0 0
    %1049 = vperm.xlu0 %1048, %v1027
    %v1050 = vpop.permute.xlu0 %1049
    %1053 = vset.pattern.permute.xlu0 0
    %1054 = vperm.xlu0 %1053, %v1028
    %v1055 = vpop.permute.xlu0 %1054
    %1058 = vset.pattern.permute.xlu0 0
    %1059 = vperm.xlu0 %1058, %v1029
    %v1060 = vpop.permute.xlu0 %1059
    %1063 = vset.pattern.permute.xlu0 0
    %1064 = vperm.xlu0 %1063, %v1030
    %v1065 = vpop.permute.xlu0 %1064
    %1068 = vset.pattern.permute.xlu0 0
    %1069 = vperm.xlu0 %1068, %v1031
    %v1070 = vpop.permute.xlu0 %1069
    %1073 = vset.pattern.permute.xlu0 0
    %1074 = vperm.xlu0 %1073, %v1032
    %v1075 = vpop.permute.xlu0 %1074
    %1078 = vset.pattern.permute.xlu0 0
    %1079 = vperm.xlu0 %1078, %v1033
    %v1080 = vpop.permute.xlu0 %1079
    %1083 = vset.pattern.permute.xlu0 0
    %1084 = vperm.xlu0 %1083, %v1034
    %v1085 = vpop.permute.xlu0 %1084
    %1088 = vset.pattern.permute.xlu0 0
    %1089 = vperm.xlu0 %1088, %v1035
    %v1090 = vpop.permute.xlu0 %1089
    %1093 = vset.pattern.permute.xlu0 0
    %1094 = vperm.xlu0 %1093, %v1036
    %v1095 = vpop.permute.xlu0 %1094
    %1098 = vset.pattern.permute.xlu0 0
    %1099 = vperm.xlu0 %1098, %v1037
    %v1100 = vpop.permute.xlu0 %1099
    %1103 = vset.pattern.permute.xlu0 0
    %1104 = vperm.xlu0 %1103, %v1038
    %v1105 = vpop.permute.xlu0 %1104
    %1108 = vset.pattern.permute.xlu0 0
    %1109 = vperm.xlu0 %1108, %v1039
    %v1110 = vpop.permute.xlu0 %1109
    %1113 = vset.pattern.permute.xlu0 0
    %1114 = vperm.xlu0 %1113, %v1040
    %v1115 = vpop.permute.xlu0 %1114
    %1118 = vset.pattern.permute.xlu0 0
    %1119 = vperm.xlu0 %1118, %v1041
    %v1120 = vpop.permute.xlu0 %1119
    %v1122 = vsub.f32 %v916, %v1045
    %v1123 = vsub.f32 %v919, %v1050
    %v1124 = vsub.f32 %v924, %v1055
    %v1125 = vsub.f32 %v927, %v1060
    %v1126 = vsub.f32 %v932, %v1065
    %v1127 = vsub.f32 %v935, %v1070
    %v1128 = vsub.f32 %v940, %v1075
    %v1129 = vsub.f32 %v943, %v1080
    %v1130 = vsub.f32 %v948, %v1085
    %v1131 = vsub.f32 %v951, %v1090
    %v1132 = vsub.f32 %v956, %v1095
    %v1133 = vsub.f32 %v959, %v1100
    %v1134 = vsub.f32 %v964, %v1105
    %v1135 = vsub.f32 %v967, %v1110
    %v1136 = vsub.f32 %v972, %v1115
    %v1137 = vsub.f32 %v975, %v1120
    %v1138 = vmul.f32 %v1122, 1.442695
    %v1139 = vpow.pop %v1138
    %v1140 = vmul.f32 %v1123, 1.442695
    %v1141 = vpow.pop %v1140
    %v1142 = vmul.f32 %v1124, 1.442695
    %v1143 = vpow.pop %v1142
    %v1144 = vmul.f32 %v1125, 1.442695
    %v1145 = vpow.pop %v1144
    %v1146 = vmul.f32 %v1126, 1.442695
    %v1147 = vpow.pop %v1146
    %v1148 = vmul.f32 %v1127, 1.442695
    %v1149 = vpow.pop %v1148
    %v1150 = vmul.f32 %v1128, 1.442695
    %v1151 = vpow.pop %v1150
    %v1152 = vmul.f32 %v1129, 1.442695
    %v1153 = vpow.pop %v1152
    %v1154 = vmul.f32 %v1130, 1.442695
    %v1155 = vpow.pop %v1154
    %v1156 = vmul.f32 %v1131, 1.442695
    %v1157 = vpow.pop %v1156
    %v1158 = vmul.f32 %v1132, 1.442695
    %v1159 = vpow.pop %v1158
    %v1160 = vmul.f32 %v1133, 1.442695
    %v1161 = vpow.pop %v1160
    %v1162 = vmul.f32 %v1134, 1.442695
    %v1163 = vpow.pop %v1162
    %v1164 = vmul.f32 %v1135, 1.442695
    %v1165 = vpow.pop %v1164
    %v1166 = vmul.f32 %v1136, 1.442695
    %v1167 = vpow.pop %v1166
    %v1168 = vmul.f32 %v1137, 1.442695
    %v1169 = vpow.pop %v1168
    %s1170 = smul.u32 0, 128
    %v1171 = vlaneseq
    %v1172 = vand.u32 %v1171, 127
    %v1173 = vstv %s1170
    %v1174 = vadd.s32 %v1173, %v1172
    %vm1175 = vcmp.lt.s32.totalorder %v1174, 8
    %v1176 = vsel %vm1175, %v1139, 0.0
    %v1177 = vsel %vm1175, %v1141, 0.0
    %v1178 = vsel %vm1175, %v1143, 0.0
    %v1179 = vsel %vm1175, %v1145, 0.0
    %v1180 = vsel %vm1175, %v1147, 0.0
    %v1181 = vsel %vm1175, %v1149, 0.0
    %v1182 = vsel %vm1175, %v1151, 0.0
    %v1183 = vsel %vm1175, %v1153, 0.0
    %v1184 = vsel %vm1175, %v1155, 0.0
    %v1185 = vsel %vm1175, %v1157, 0.0
    %v1186 = vsel %vm1175, %v1159, 0.0
    %v1187 = vsel %vm1175, %v1161, 0.0
    %v1188 = vsel %vm1175, %v1163, 0.0
    %v1189 = vsel %vm1175, %v1165, 0.0
    %v1190 = vsel %vm1175, %v1167, 0.0
    %v1191 = vsel %vm1175, %v1169, 0.0
    %v1192 = vsub.f32 %v978, %v1026
    %v1193 = vsub.f32 %v979, %v1027
    %v1194 = vsub.f32 %v980, %v1028
    %v1195 = vsub.f32 %v981, %v1029
    %v1196 = vsub.f32 %v982, %v1030
    %v1197 = vsub.f32 %v983, %v1031
    %v1198 = vsub.f32 %v984, %v1032
    %v1199 = vsub.f32 %v985, %v1033
    %v1200 = vsub.f32 %v986, %v1034
    %v1201 = vsub.f32 %v987, %v1035
    %v1202 = vsub.f32 %v988, %v1036
    %v1203 = vsub.f32 %v989, %v1037
    %v1204 = vsub.f32 %v990, %v1038
    %v1205 = vsub.f32 %v991, %v1039
    %v1206 = vsub.f32 %v992, %v1040
    %v1207 = vsub.f32 %v993, %v1041
    %v1208 = vmul.f32 %v1192, 1.442695
    %v1209 = vpow.pop %v1208
    %v1210 = vmul.f32 %v1193, 1.442695
    %v1211 = vpow.pop %v1210
    %v1212 = vmul.f32 %v1194, 1.442695
    %v1213 = vpow.pop %v1212
    %v1214 = vmul.f32 %v1195, 1.442695
    %v1215 = vpow.pop %v1214
    %v1216 = vmul.f32 %v1196, 1.442695
    %v1217 = vpow.pop %v1216
    %v1218 = vmul.f32 %v1197, 1.442695
    %v1219 = vpow.pop %v1218
    %v1220 = vmul.f32 %v1198, 1.442695
    %v1221 = vpow.pop %v1220
    %v1222 = vmul.f32 %v1199, 1.442695
    %v1223 = vpow.pop %v1222
    %v1224 = vmul.f32 %v1200, 1.442695
    %v1225 = vpow.pop %v1224
    %v1226 = vmul.f32 %v1201, 1.442695
    %v1227 = vpow.pop %v1226
    %v1228 = vmul.f32 %v1202, 1.442695
    %v1229 = vpow.pop %v1228
    %v1230 = vmul.f32 %v1203, 1.442695
    %v1231 = vpow.pop %v1230
    %v1232 = vmul.f32 %v1204, 1.442695
    %v1233 = vpow.pop %v1232
    %v1234 = vmul.f32 %v1205, 1.442695
    %v1235 = vpow.pop %v1234
    %v1236 = vmul.f32 %v1206, 1.442695
    %v1237 = vpow.pop %v1236
    %v1238 = vmul.f32 %v1207, 1.442695
    %v1239 = vpow.pop %v1238
    %v1240 = vld [vmem:[#allocation4] sm:$0xff]
    %v1241 = vld [vmem:[#allocation4 + $0x8] sm:$0xff]
    %v1242 = vld [vmem:[#allocation4 + $0x10] sm:$0xff]
    %v1243 = vld [vmem:[#allocation4 + $0x18] sm:$0xff]
    %v1244 = vld [vmem:[#allocation4 + $0x20] sm:$0xff]
    %v1245 = vld [vmem:[#allocation4 + $0x28] sm:$0xff]
    %v1246 = vld [vmem:[#allocation4 + $0x30] sm:$0xff]
    %v1247 = vld [vmem:[#allocation4 + $0x38] sm:$0xff]
    %v1248 = vld [vmem:[#allocation4 + $0x40] sm:$0xff]
    %v1249 = vld [vmem:[#allocation4 + $0x48] sm:$0xff]
    %v1250 = vld [vmem:[#allocation4 + $0x50] sm:$0xff]
    %v1251 = vld [vmem:[#allocation4 + $0x58] sm:$0xff]
    %v1252 = vld [vmem:[#allocation4 + $0x60] sm:$0xff]
    %v1253 = vld [vmem:[#allocation4 + $0x68] sm:$0xff]
    %v1254 = vld [vmem:[#allocation4 + $0x70] sm:$0xff]
    %v1255 = vld [vmem:[#allocation4 + $0x78] sm:$0xff]
    %v1256 = vmul.f32 %v1209, %v1240
    %v1257 = vmul.f32 %v1211, %v1241
    %v1258 = vmul.f32 %v1213, %v1242
    %v1259 = vmul.f32 %v1215, %v1243
    %v1260 = vmul.f32 %v1217, %v1244
    %v1261 = vmul.f32 %v1219, %v1245
    %v1262 = vmul.f32 %v1221, %v1246
    %v1263 = vmul.f32 %v1223, %v1247
    %v1264 = vmul.f32 %v1225, %v1248
    %v1265 = vmul.f32 %v1227, %v1249
    %v1266 = vmul.f32 %v1229, %v1250
    %v1267 = vmul.f32 %v1231, %v1251
    %v1268 = vmul.f32 %v1233, %v1252
    %v1269 = vmul.f32 %v1235, %v1253
    %v1270 = vmul.f32 %v1237, %v1254
    %v1271 = vmul.f32 %v1239, %v1255
    %1272 = vadd.xlane.f32.xlu0 %v1176
    %v1273 = vpop.xlane.xlu0 %1272
    %1274 = vadd.xlane.f32.xlu0 %v1177
    %v1275 = vpop.xlane.xlu0 %1274
    %1276 = vadd.xlane.f32.xlu0 %v1178
    %v1277 = vpop.xlane.xlu0 %1276
    %1278 = vadd.xlane.f32.xlu0 %v1179
    %v1279 = vpop.xlane.xlu0 %1278
    %1280 = vadd.xlane.f32.xlu0 %v1180
    %v1281 = vpop.xlane.xlu0 %1280
    %1282 = vadd.xlane.f32.xlu0 %v1181
    %v1283 = vpop.xlane.xlu0 %1282
    %1284 = vadd.xlane.f32.xlu0 %v1182
    %v1285 = vpop.xlane.xlu0 %1284
    %1286 = vadd.xlane.f32.xlu0 %v1183
    %v1287 = vpop.xlane.xlu0 %1286
    %1288 = vadd.xlane.f32.xlu0 %v1184
    %v1289 = vpop.xlane.xlu0 %1288
    %1290 = vadd.xlane.f32.xlu0 %v1185
    %v1291 = vpop.xlane.xlu0 %1290
    %1292 = vadd.xlane.f32.xlu0 %v1186
    %v1293 = vpop.xlane.xlu0 %1292
    %1294 = vadd.xlane.f32.xlu0 %v1187
    %v1295 = vpop.xlane.xlu0 %1294
    %1296 = vadd.xlane.f32.xlu0 %v1188
    %v1297 = vpop.xlane.xlu0 %1296
    %1298 = vadd.xlane.f32.xlu0 %v1189
    %v1299 = vpop.xlane.xlu0 %1298
    %1300 = vadd.xlane.f32.xlu0 %v1190
    %v1301 = vpop.xlane.xlu0 %1300
    %1302 = vadd.xlane.f32.xlu0 %v1191
    %v1303 = vpop.xlane.xlu0 %1302
    %v1304 = vadd.f32 %v1256, %v1273
    %v1305 = vadd.f32 %v1257, %v1275
    %v1306 = vadd.f32 %v1258, %v1277
    %v1307 = vadd.f32 %v1259, %v1279
    %v1308 = vadd.f32 %v1260, %v1281
    %v1309 = vadd.f32 %v1261, %v1283
    %v1310 = vadd.f32 %v1262, %v1285
    %v1311 = vadd.f32 %v1263, %v1287
    %v1312 = vadd.f32 %v1264, %v1289
    %v1313 = vadd.f32 %v1265, %v1291
    %v1314 = vadd.f32 %v1266, %v1293
    %v1315 = vadd.f32 %v1267, %v1295
    %v1316 = vadd.f32 %v1268, %v1297
    %v1317 = vadd.f32 %v1269, %v1299
    %v1318 = vadd.f32 %v1270, %v1301
    %v1319 = vadd.f32 %v1271, %v1303
    %vm1320 = vcmask 7168
    %1321 = vst.msk [vmem:[#allocation4] sm:$0xff] %vm1320, %v1304
    %1322 = vst.msk [vmem:[#allocation4 + $0x8] sm:$0xff] %vm1320, %v1305
    %1323 = vst.msk [vmem:[#allocation4 + $0x10] sm:$0xff] %vm1320, %v1306
    %1324 = vst.msk [vmem:[#allocation4 + $0x18] sm:$0xff] %vm1320, %v1307
    %1325 = vst.msk [vmem:[#allocation4 + $0x20] sm:$0xff] %vm1320, %v1308
    %1326 = vst.msk [vmem:[#allocation4 + $0x28] sm:$0xff] %vm1320, %v1309
    %1327 = vst.msk [vmem:[#allocation4 + $0x30] sm:$0xff] %vm1320, %v1310
    %1328 = vst.msk [vmem:[#allocation4 + $0x38] sm:$0xff] %vm1320, %v1311
    %1329 = vst.msk [vmem:[#allocation4 + $0x40] sm:$0xff] %vm1320, %v1312
    %1330 = vst.msk [vmem:[#allocation4 + $0x48] sm:$0xff] %vm1320, %v1313
    %1331 = vst.msk [vmem:[#allocation4 + $0x50] sm:$0xff] %vm1320, %v1314
    %1332 = vst.msk [vmem:[#allocation4 + $0x58] sm:$0xff] %vm1320, %v1315
    %1333 = vst.msk [vmem:[#allocation4 + $0x60] sm:$0xff] %vm1320, %v1316
    %1334 = vst.msk [vmem:[#allocation4 + $0x68] sm:$0xff] %vm1320, %v1317
    %1335 = vst.msk [vmem:[#allocation4 + $0x70] sm:$0xff] %vm1320, %v1318
    %1336 = vst.msk [vmem:[#allocation4 + $0x78] sm:$0xff] %vm1320, %v1319
    %v1337 = vld [vmem:[#allocation5] sm:$0xff]
    %v1338 = vld [vmem:[#allocation5 + $0x8] sm:$0xff]
    %v1339 = vld [vmem:[#allocation5 + $0x10] sm:$0xff]
    %v1340 = vld [vmem:[#allocation5 + $0x18] sm:$0xff]
    %v1341 = vld [vmem:[#allocation5 + $0x20] sm:$0xff]
    %v1342 = vld [vmem:[#allocation5 + $0x28] sm:$0xff]
    %v1343 = vld [vmem:[#allocation5 + $0x30] sm:$0xff]
    %v1344 = vld [vmem:[#allocation5 + $0x38] sm:$0xff]
    %v1345 = vld [vmem:[#allocation5 + $0x40] sm:$0xff]
    %v1346 = vld [vmem:[#allocation5 + $0x48] sm:$0xff]
    %v1347 = vld [vmem:[#allocation5 + $0x50] sm:$0xff]
    %v1348 = vld [vmem:[#allocation5 + $0x58] sm:$0xff]
    %v1349 = vld [vmem:[#allocation5 + $0x60] sm:$0xff]
    %v1350 = vld [vmem:[#allocation5 + $0x68] sm:$0xff]
    %v1351 = vld [vmem:[#allocation5 + $0x70] sm:$0xff]
    %v1352 = vld [vmem:[#allocation5 + $0x78] sm:$0xff]
    %1354 = vset.pattern.permute.xlu0 0
    %1355 = vperm.xlu0 %1354, %v1209
    %v1356 = vpop.permute.xlu0 %1355
    %1359 = vset.pattern.permute.xlu0 0
    %1360 = vperm.xlu0 %1359, %v1211
    %v1361 = vpop.permute.xlu0 %1360
    %1364 = vset.pattern.permute.xlu0 0
    %1365 = vperm.xlu0 %1364, %v1213
    %v1366 = vpop.permute.xlu0 %1365
    %1369 = vset.pattern.permute.xlu0 0
    %1370 = vperm.xlu0 %1369, %v1215
    %v1371 = vpop.permute.xlu0 %1370
    %1374 = vset.pattern.permute.xlu0 0
    %1375 = vperm.xlu0 %1374, %v1217
    %v1376 = vpop.permute.xlu0 %1375
    %1379 = vset.pattern.permute.xlu0 0
    %1380 = vperm.xlu0 %1379, %v1219
    %v1381 = vpop.permute.xlu0 %1380
    %1384 = vset.pattern.permute.xlu0 0
    %1385 = vperm.xlu0 %1384, %v1221
    %v1386 = vpop.permute.xlu0 %1385
    %1389 = vset.pattern.permute.xlu0 0
    %1390 = vperm.xlu0 %1389, %v1223
    %v1391 = vpop.permute.xlu0 %1390
    %1394 = vset.pattern.permute.xlu0 0
    %1395 = vperm.xlu0 %1394, %v1225
    %v1396 = vpop.permute.xlu0 %1395
    %1399 = vset.pattern.permute.xlu0 0
    %1400 = vperm.xlu0 %1399, %v1227
    %v1401 = vpop.permute.xlu0 %1400
    %1404 = vset.pattern.permute.xlu0 0
    %1405 = vperm.xlu0 %1404, %v1229
    %v1406 = vpop.permute.xlu0 %1405
    %1409 = vset.pattern.permute.xlu0 0
    %1410 = vperm.xlu0 %1409, %v1231
    %v1411 = vpop.permute.xlu0 %1410
    %1414 = vset.pattern.permute.xlu0 0
    %1415 = vperm.xlu0 %1414, %v1233
    %v1416 = vpop.permute.xlu0 %1415
    %1419 = vset.pattern.permute.xlu0 0
    %1420 = vperm.xlu0 %1419, %v1235
    %v1421 = vpop.permute.xlu0 %1420
    %1424 = vset.pattern.permute.xlu0 0
    %1425 = vperm.xlu0 %1424, %v1237
    %v1426 = vpop.permute.xlu0 %1425
    %1429 = vset.pattern.permute.xlu0 0
    %1430 = vperm.xlu0 %1429, %v1239
    %v1431 = vpop.permute.xlu0 %1430
    %v1433 = vmul.f32 %v1356, %v1337
    %v1434 = vmul.f32 %v1361, %v1338
    %v1435 = vmul.f32 %v1366, %v1339
    %v1436 = vmul.f32 %v1371, %v1340
    %v1437 = vmul.f32 %v1376, %v1341
    %v1438 = vmul.f32 %v1381, %v1342
    %v1439 = vmul.f32 %v1386, %v1343
    %v1440 = vmul.f32 %v1391, %v1344
    %v1441 = vmul.f32 %v1396, %v1345
    %v1442 = vmul.f32 %v1401, %v1346
    %v1443 = vmul.f32 %v1406, %v1347
    %v1444 = vmul.f32 %v1411, %v1348
    %v1445 = vmul.f32 %v1416, %v1349
    %v1446 = vmul.f32 %v1421, %v1350
    %v1447 = vmul.f32 %v1426, %v1351
    %v1448 = vmul.f32 %v1431, %v1352
    %v1449 = vpack.c.bf16 %v1177, %v1176
    %v1450 = vpack.c.bf16 %v1179, %v1178
    %v1451 = vpack.c.bf16 %v1181, %v1180
    %v1452 = vpack.c.bf16 %v1183, %v1182
    %v1453 = vpack.c.bf16 %v1185, %v1184
    %v1454 = vpack.c.bf16 %v1187, %v1186
    %v1455 = vpack.c.bf16 %v1189, %v1188
    %v1456 = vpack.c.bf16 %v1191, %v1190
    %1457 = vmatprep.subr.bf16.mxu0 0
    %1458 = vmatpush1.bf16.msra.mxu0 %v816
    %1459 = vmatprep.subr.bf16.mxu0 0
    %1460 = vmatpush1.bf16.msra.mxu0 %v815
    %1461 = vmatprep.subr.bf16.mxu0 0
    %1462 = vmatpush1.bf16.msra.mxu0 %v814
    %1463 = vmatprep.subr.bf16.mxu0 0
    %1464 = vmatpush1.bf16.msra.mxu0 %v813
    %1465 = vmatprep.subr.bf16.mxu0 0
    %1466 = vmatpush1.bf16.msra.mxu0 %v812
    %1467 = vmatprep.subr.bf16.mxu0 0
    %1468 = vmatpush1.bf16.msra.mxu0 %v811
    %1469 = vmatprep.subr.bf16.mxu0 0
    %1470 = vmatpush1.bf16.msra.mxu0 %v810
    %1471 = vmatprep.subr.bf16.mxu0 0
    %1472 = vmatpush1.bf16.msra.mxu0 %v809
    %1473 = vmatprep.subr.bf16.mxu0 0
    %1474 = vmatpush2.bf16.msra.mxu0 0
    %1475 = vmatprep.subr.bf16.mxu0 0
    %1476 = vmatpush2.bf16.msra.mxu0 0
    %1477 = vmatprep.subr.bf16.mxu0 0
    %1478 = vmatpush2.bf16.msra.mxu0 0
    %1479 = vmatprep.subr.bf16.mxu0 0
    %1480 = vmatpush2.bf16.msra.mxu0 0
    %1481 = vmatprep.subr.bf16.mxu0 0
    %1482 = vmatpush2.bf16.msra.mxu0 0
    %1483 = vmatprep.subr.bf16.mxu0 0
    %1484 = vmatpush2.bf16.msra.mxu0 0
    %1485 = vmatprep.subr.bf16.mxu0 0
    %1486 = vmatpush2.bf16.msra.mxu0 0
    %1487 = vmatprep.subr.bf16.mxu0 0
    %1488 = vmatpush2.bf16.msra.mxu0 0
    %1489 = vmatprep.mubr.bf16.mxu0 0
    %1490 = vmatmul.mubr.bf16.gmra.mxu0 %v1449
    %v1491 = vpop.f32.mrf.mxu0
    %v1492 = vadd.f32 0.0, %v1491
    %v1493 = vpop.f32.mrf.mxu0
    %v1494 = vpop.f32.mrf.mxu0
    %v1495 = vadd.f32 0.0, %v1494
    %v1496 = vpop.f32.mrf.mxu0
    %1497 = vmatprep.mubr.bf16.mxu0 0
    %1498 = vmatmul.mubr.bf16.gmra.mxu0 %v1450
    %v1499 = vpop.f32.mrf.mxu0
    %v1500 = vadd.f32 0.0, %v1499
    %v1501 = vpop.f32.mrf.mxu0
    %v1502 = vpop.f32.mrf.mxu0
    %v1503 = vadd.f32 0.0, %v1502
    %v1504 = vpop.f32.mrf.mxu0
    %1505 = vmatprep.mubr.bf16.mxu0 0
    %1506 = vmatmul.mubr.bf16.gmra.mxu0 %v1451
    %v1507 = vpop.f32.mrf.mxu0
    %v1508 = vadd.f32 0.0, %v1507
    %v1509 = vpop.f32.mrf.mxu0
    %v1510 = vpop.f32.mrf.mxu0
    %v1511 = vadd.f32 0.0, %v1510
    %v1512 = vpop.f32.mrf.mxu0
    %1513 = vmatprep.mubr.bf16.mxu0 0
    %1514 = vmatmul.mubr.bf16.gmra.mxu0 %v1452
    %v1515 = vpop.f32.mrf.mxu0
    %v1516 = vadd.f32 0.0, %v1515
    %v1517 = vpop.f32.mrf.mxu0
    %v1518 = vpop.f32.mrf.mxu0
    %v1519 = vadd.f32 0.0, %v1518
    %v1520 = vpop.f32.mrf.mxu0
    %1521 = vmatprep.mubr.bf16.mxu0 0
    %1522 = vmatmul.mubr.bf16.gmra.mxu0 %v1453
    %v1523 = vpop.f32.mrf.mxu0
    %v1524 = vadd.f32 0.0, %v1523
    %v1525 = vpop.f32.mrf.mxu0
    %v1526 = vpop.f32.mrf.mxu0
    %v1527 = vadd.f32 0.0, %v1526
    %v1528 = vpop.f32.mrf.mxu0
    %1529 = vmatprep.mubr.bf16.mxu0 0
    %1530 = vmatmul.mubr.bf16.gmra.mxu0 %v1454
    %v1531 = vpop.f32.mrf.mxu0
    %v1532 = vadd.f32 0.0, %v1531
    %v1533 = vpop.f32.mrf.mxu0
    %v1534 = vpop.f32.mrf.mxu0
    %v1535 = vadd.f32 0.0, %v1534
    %v1536 = vpop.f32.mrf.mxu0
    %1537 = vmatprep.mubr.bf16.mxu0 0
    %1538 = vmatmul.mubr.bf16.gmra.mxu0 %v1455
    %v1539 = vpop.f32.mrf.mxu0
    %v1540 = vadd.f32 0.0, %v1539
    %v1541 = vpop.f32.mrf.mxu0
    %v1542 = vpop.f32.mrf.mxu0
    %v1543 = vadd.f32 0.0, %v1542
    %v1544 = vpop.f32.mrf.mxu0
    %1545 = vmatprep.mubr.bf16.mxu0 0
    %1546 = vmatmul.mubr.bf16.gmra.mxu0 %v1456
    %v1547 = vpop.f32.mrf.mxu0
    %v1548 = vadd.f32 0.0, %v1547
    %v1549 = vpop.f32.mrf.mxu0
    %v1550 = vpop.f32.mrf.mxu0
    %v1551 = vadd.f32 0.0, %v1550
    %v1552 = vpop.f32.mrf.mxu0
    %1553 = vdwg.mxu0
    %v1554 = vadd.f32 %v1433, %v1492
    %v1555 = vadd.f32 %v1434, %v1495
    %v1556 = vadd.f32 %v1435, %v1500
    %v1557 = vadd.f32 %v1436, %v1503
    %v1558 = vadd.f32 %v1437, %v1508
    %v1559 = vadd.f32 %v1438, %v1511
    %v1560 = vadd.f32 %v1439, %v1516
    %v1561 = vadd.f32 %v1440, %v1519
    %v1562 = vadd.f32 %v1441, %v1524
    %v1563 = vadd.f32 %v1442, %v1527
    %v1564 = vadd.f32 %v1443, %v1532
    %v1565 = vadd.f32 %v1444, %v1535
    %v1566 = vadd.f32 %v1445, %v1540
    %v1567 = vadd.f32 %v1446, %v1543
    %v1568 = vadd.f32 %v1447, %v1548
    %v1569 = vadd.f32 %v1448, %v1551
    %1570 = vst [vmem:[#allocation5] sm:$0xff] %v1554
    %1571 = vst [vmem:[#allocation5 + $0x8] sm:$0xff] %v1555
    %1572 = vst [vmem:[#allocation5 + $0x10] sm:$0xff] %v1556
    %1573 = vst [vmem:[#allocation5 + $0x18] sm:$0xff] %v1557
    %1574 = vst [vmem:[#allocation5 + $0x20] sm:$0xff] %v1558
    %1575 = vst [vmem:[#allocation5 + $0x28] sm:$0xff] %v1559
    %1576 = vst [vmem:[#allocation5 + $0x30] sm:$0xff] %v1560
    %1577 = vst [vmem:[#allocation5 + $0x38] sm:$0xff] %v1561
    %1578 = vst [vmem:[#allocation5 + $0x40] sm:$0xff] %v1562
    %1579 = vst [vmem:[#allocation5 + $0x48] sm:$0xff] %v1563
    %1580 = vst [vmem:[#allocation5 + $0x50] sm:$0xff] %v1564
    %1581 = vst [vmem:[#allocation5 + $0x58] sm:$0xff] %v1565
    %1582 = vst [vmem:[#allocation5 + $0x60] sm:$0xff] %v1566
    %1583 = vst [vmem:[#allocation5 + $0x68] sm:$0xff] %v1567
    %1584 = vst [vmem:[#allocation5 + $0x70] sm:$0xff] %v1568
    %1585 = vst [vmem:[#allocation5 + $0x78] sm:$0xff] %v1569
    %1586 = vst.msk [vmem:[#allocation3] sm:$0xff] %vm1320, %v1026
    %1587 = vst.msk [vmem:[#allocation3 + $0x8] sm:$0xff] %vm1320, %v1027
    %1588 = vst.msk [vmem:[#allocation3 + $0x10] sm:$0xff] %vm1320, %v1028
    %1589 = vst.msk [vmem:[#allocation3 + $0x18] sm:$0xff] %vm1320, %v1029
    %1590 = vst.msk [vmem:[#allocation3 + $0x20] sm:$0xff] %vm1320, %v1030
    %1591 = vst.msk [vmem:[#allocation3 + $0x28] sm:$0xff] %vm1320, %v1031
    %1592 = vst.msk [vmem:[#allocation3 + $0x30] sm:$0xff] %vm1320, %v1032
    %1593 = vst.msk [vmem:[#allocation3 + $0x38] sm:$0xff] %vm1320, %v1033
    %1594 = vst.msk [vmem:[#allocation3 + $0x40] sm:$0xff] %vm1320, %v1034
    %1595 = vst.msk [vmem:[#allocation3 + $0x48] sm:$0xff] %vm1320, %v1035
    %1596 = vst.msk [vmem:[#allocation3 + $0x50] sm:$0xff] %vm1320, %v1036
    %1597 = vst.msk [vmem:[#allocation3 + $0x58] sm:$0xff] %vm1320, %v1037
    %1598 = vst.msk [vmem:[#allocation3 + $0x60] sm:$0xff] %vm1320, %v1038
    %1599 = vst.msk [vmem:[#allocation3 + $0x68] sm:$0xff] %vm1320, %v1039
    %1600 = vst.msk [vmem:[#allocation3 + $0x70] sm:$0xff] %vm1320, %v1040
    %1601 = vst.msk [vmem:[#allocation3 + $0x78] sm:$0xff] %vm1320, %v1041
    // Predicated region
    $region30: #{tpu_custom_call.1} parent=1 // pred_check
      %p1602 = pneg %p57
    $region31: #{tpu_custom_call.1} parent=1 // pred_check_branch
      %1604 = sbr.rel (%p1602) target = $region33
    $region32: #{tpu_custom_call.1} parent=1 // pred_region
      %v1605 = vld [vmem:[#allocation4] sm:$0xff]
      %v1606 = vld [vmem:[#allocation4 + $0x8] sm:$0xff]
      %v1607 = vld [vmem:[#allocation4 + $0x10] sm:$0xff]
      %v1608 = vld [vmem:[#allocation4 + $0x18] sm:$0xff]
      %v1609 = vld [vmem:[#allocation4 + $0x20] sm:$0xff]
      %v1610 = vld [vmem:[#allocation4 + $0x28] sm:$0xff]
      %v1611 = vld [vmem:[#allocation4 + $0x30] sm:$0xff]
      %v1612 = vld [vmem:[#allocation4 + $0x38] sm:$0xff]
      %v1613 = vld [vmem:[#allocation4 + $0x40] sm:$0xff]
      %v1614 = vld [vmem:[#allocation4 + $0x48] sm:$0xff]
      %v1615 = vld [vmem:[#allocation4 + $0x50] sm:$0xff]
      %v1616 = vld [vmem:[#allocation4 + $0x58] sm:$0xff]
      %v1617 = vld [vmem:[#allocation4 + $0x60] sm:$0xff]
      %v1618 = vld [vmem:[#allocation4 + $0x68] sm:$0xff]
      %v1619 = vld [vmem:[#allocation4 + $0x70] sm:$0xff]
      %v1620 = vld [vmem:[#allocation4 + $0x78] sm:$0xff]
      %v1621 = vrcp.pop %v1605
      %v1622 = vrcp.pop %v1606
      %v1623 = vrcp.pop %v1607
      %v1624 = vrcp.pop %v1608
      %v1625 = vrcp.pop %v1609
      %v1626 = vrcp.pop %v1610
      %v1627 = vrcp.pop %v1611
      %v1628 = vrcp.pop %v1612
      %v1629 = vrcp.pop %v1613
      %v1630 = vrcp.pop %v1614
      %v1631 = vrcp.pop %v1615
      %v1632 = vrcp.pop %v1616
      %v1633 = vrcp.pop %v1617
      %v1634 = vrcp.pop %v1618
      %v1635 = vrcp.pop %v1619
      %v1636 = vrcp.pop %v1620
      %v1637 = vld [vmem:[#allocation5] sm:$0xff]
      %v1638 = vld [vmem:[#allocation5 + $0x8] sm:$0xff]
      %v1639 = vld [vmem:[#allocation5 + $0x10] sm:$0xff]
      %v1640 = vld [vmem:[#allocation5 + $0x18] sm:$0xff]
      %v1641 = vld [vmem:[#allocation5 + $0x20] sm:$0xff]
      %v1642 = vld [vmem:[#allocation5 + $0x28] sm:$0xff]
      %v1643 = vld [vmem:[#allocation5 + $0x30] sm:$0xff]
      %v1644 = vld [vmem:[#allocation5 + $0x38] sm:$0xff]
      %v1645 = vld [vmem:[#allocation5 + $0x40] sm:$0xff]
      %v1646 = vld [vmem:[#allocation5 + $0x48] sm:$0xff]
      %v1647 = vld [vmem:[#allocation5 + $0x50] sm:$0xff]
      %v1648 = vld [vmem:[#allocation5 + $0x58] sm:$0xff]
      %v1649 = vld [vmem:[#allocation5 + $0x60] sm:$0xff]
      %v1650 = vld [vmem:[#allocation5 + $0x68] sm:$0xff]
      %v1651 = vld [vmem:[#allocation5 + $0x70] sm:$0xff]
      %v1652 = vld [vmem:[#allocation5 + $0x78] sm:$0xff]
      %1654 = vset.pattern.permute.xlu0 0
      %1655 = vperm.xlu0 %1654, %v1621
      %v1656 = vpop.permute.xlu0 %1655
      %1659 = vset.pattern.permute.xlu0 0
      %1660 = vperm.xlu0 %1659, %v1622
      %v1661 = vpop.permute.xlu0 %1660
      %1664 = vset.pattern.permute.xlu0 0
      %1665 = vperm.xlu0 %1664, %v1623
      %v1666 = vpop.permute.xlu0 %1665
      %1669 = vset.pattern.permute.xlu0 0
      %1670 = vperm.xlu0 %1669, %v1624
      %v1671 = vpop.permute.xlu0 %1670
      %1674 = vset.pattern.permute.xlu0 0
      %1675 = vperm.xlu0 %1674, %v1625
      %v1676 = vpop.permute.xlu0 %1675
      %1679 = vset.pattern.permute.xlu0 0
      %1680 = vperm.xlu0 %1679, %v1626
      %v1681 = vpop.permute.xlu0 %1680
      %1684 = vset.pattern.permute.xlu0 0
      %1685 = vperm.xlu0 %1684, %v1627
      %v1686 = vpop.permute.xlu0 %1685
      %1689 = vset.pattern.permute.xlu0 0
      %1690 = vperm.xlu0 %1689, %v1628
      %v1691 = vpop.permute.xlu0 %1690
      %1694 = vset.pattern.permute.xlu0 0
      %1695 = vperm.xlu0 %1694, %v1629
      %v1696 = vpop.permute.xlu0 %1695
      %1699 = vset.pattern.permute.xlu0 0
      %1700 = vperm.xlu0 %1699, %v1630
      %v1701 = vpop.permute.xlu0 %1700
      %1704 = vset.pattern.permute.xlu0 0
      %1705 = vperm.xlu0 %1704, %v1631
      %v1706 = vpop.permute.xlu0 %1705
      %1709 = vset.pattern.permute.xlu0 0
      %1710 = vperm.xlu0 %1709, %v1632
      %v1711 = vpop.permute.xlu0 %1710
      %1714 = vset.pattern.permute.xlu0 0
      %1715 = vperm.xlu0 %1714, %v1633
      %v1716 = vpop.permute.xlu0 %1715
      %1719 = vset.pattern.permute.xlu0 0
      %1720 = vperm.xlu0 %1719, %v1634
      %v1721 = vpop.permute.xlu0 %1720
      %1724 = vset.pattern.permute.xlu0 0
      %1725 = vperm.xlu0 %1724, %v1635
      %v1726 = vpop.permute.xlu0 %1725
      %1729 = vset.pattern.permute.xlu0 0
      %1730 = vperm.xlu0 %1729, %v1636
      %v1731 = vpop.permute.xlu0 %1730
      %v1733 = vmul.f32 %v1637, %v1656
      %v1734 = vmul.f32 %v1638, %v1661
      %v1735 = vmul.f32 %v1639, %v1666
      %v1736 = vmul.f32 %v1640, %v1671
      %v1737 = vmul.f32 %v1641, %v1676
      %v1738 = vmul.f32 %v1642, %v1681
      %v1739 = vmul.f32 %v1643, %v1686
      %v1740 = vmul.f32 %v1644, %v1691
      %v1741 = vmul.f32 %v1645, %v1696
      %v1742 = vmul.f32 %v1646, %v1701
      %v1743 = vmul.f32 %v1647, %v1706
      %v1744 = vmul.f32 %v1648, %v1711
      %v1745 = vmul.f32 %v1649, %v1716
      %v1746 = vmul.f32 %v1650, %v1721
      %v1747 = vmul.f32 %v1651, %v1726
      %v1748 = vmul.f32 %v1652, %v1731
      %1749 = vst [vmem:[#allocation12] sm:$0xff] %v1733
      %1750 = vst [vmem:[#allocation12 + $0x8] sm:$0xff] %v1734
      %1751 = vst [vmem:[#allocation12 + $0x10] sm:$0xff] %v1735
      %1752 = vst [vmem:[#allocation12 + $0x18] sm:$0xff] %v1736
      %1753 = vst [vmem:[#allocation12 + $0x20] sm:$0xff] %v1737
      %1754 = vst [vmem:[#allocation12 + $0x28] sm:$0xff] %v1738
      %1755 = vst [vmem:[#allocation12 + $0x30] sm:$0xff] %v1739
      %1756 = vst [vmem:[#allocation12 + $0x38] sm:$0xff] %v1740
      %1757 = vst [vmem:[#allocation12 + $0x40] sm:$0xff] %v1741
      %1758 = vst [vmem:[#allocation12 + $0x48] sm:$0xff] %v1742
      %1759 = vst [vmem:[#allocation12 + $0x50] sm:$0xff] %v1743
      %1760 = vst [vmem:[#allocation12 + $0x58] sm:$0xff] %v1744
      %1761 = vst [vmem:[#allocation12 + $0x60] sm:$0xff] %v1745
      %1762 = vst [vmem:[#allocation12 + $0x68] sm:$0xff] %v1746
      %1763 = vst [vmem:[#allocation12 + $0x70] sm:$0xff] %v1747
      %1764 = vst [vmem:[#allocation12 + $0x78] sm:$0xff] %v1748
    $region33: #{tpu_custom_call.1} parent=1 // pred_fallthru
      _
    // Predicated region
    $region34: #{tpu_custom_call.1} parent=1 // pred_check
      _
    $region35: #{tpu_custom_call.1} parent=1 // pred_check_branch
      %1766 = sbr.rel (0) target = $region37
    $region36: #{tpu_custom_call.1} parent=1 // pred_region
      %s1768 = ssub.s32 2048, 2048
      %1769 = vsyncadd [#allocation8], %s1768
      %s1770 = sshll.u32 [#allocation12], 4
      %s1771 = int_to_ptr.vmem [resolvable:$true] %s1770
      %1776 = dma.vmem_to_hbm [thread:$0]  %s1771, 2048, %s3, [#allocation8], 128, 128, 8
    $region37: #{tpu_custom_call.1} parent=1 // pred_fallthru
      _
    // Predicated region
    $region38: #{tpu_custom_call.1} parent=1 // pred_check
      _
    $region39: #{tpu_custom_call.1} parent=1 // pred_check_branch
      %1778 = sbr.rel (0) target = $region41
    $region40: #{tpu_custom_call.1} parent=1 // pred_region
      %1779 = dma.done [#allocation8], 2048
    $region41: #{tpu_custom_call.1} parent=1 // pred_fallthru
      _
    %1780 = vsyncpa [#allocation7], 1
    %1781 = vsyncpa [#allocation10], 1
    %1782 = vsyncpa [#allocation8], 1

</llo_original>
